<compile_context>
chip_gen: v6e
topology: v6e:2x2x1
jax: 0.10.0
libtpu: 0.0.40
codegen_flags: <defaults>
</compile_context>

<pallas_src>
import functools
import math

import jax
import jax.numpy as jnp
from jax import lax
from jax.experimental import pallas as pl
from jax.experimental.pallas import tpu as pltpu

EPS = 1e-5
MASK_FILL = -1e9


def _layer_norm(x, gamma, beta):
    mean = jnp.mean(x, axis=-1, keepdims=True)
    var = jnp.mean((x - mean) ** 2, axis=-1, keepdims=True)
    return (x - mean) * lax.rsqrt(var + EPS) * gamma + beta


def _gelu_exact(x):
    # nn.GELU() default = exact erf formulation
    return 0.5 * x * (1.0 + lax.erf(x * jnp.float32(1.0 / math.sqrt(2.0))))


def transformer_layer_kernel(x_q_ref, x_full_ref, mask_ref,
                             ln1_g_ref, ln1_b_ref,
                             wq_ref, bq_ref, wkv_ref, bkv_ref,
                             wproj_ref, bproj_ref,
                             ln2_g_ref, ln2_b_ref,
                             w1_ref, b1_ref, w2_ref, b2_ref,
                             o_ref, acc_ref, *, n_heads):
    """One transformer layer for one (batch, query-tile) grid step."""
    xq = x_q_ref[0]          # (tq, C) f32 — query rows (residual / FF rows)
    xf = x_full_ref[0]       # (N,  C) f32 — full sequence (for K/V)
    maskb = mask_ref[0]      # (tq, N) f32
    tq, C = xq.shape
    hd = C // n_heads
    scale = jnp.float32(hd ** -0.5)

    ln1_g = ln1_g_ref[0]
    ln1_b = ln1_b_ref[0]

    # ---------------- attention branch: x = PreNorm(MHA)(x) + x ----------------
    hq = _layer_norm(xq, ln1_g, ln1_b)
    hf = _layer_norm(xf, ln1_g, ln1_b)

    # q for the query tile; k, v for the full sequence. Scale folded into q.
    q = (jnp.dot(hq.astype(jnp.bfloat16), wq_ref[...],
                 preferred_element_type=jnp.float32) + bq_ref[0]) * scale   # (tq, C)
    kv = jnp.dot(hf.astype(jnp.bfloat16), wkv_ref[...],
                 preferred_element_type=jnp.float32) + bkv_ref[0]           # (N, 2C)
    q16 = q.astype(jnp.bfloat16)
    k16 = kv[:, :C].astype(jnp.bfloat16)
    v16 = kv[:, C:].astype(jnp.bfloat16)

    # mask bias computed once (not per head)
    bias = jnp.where(maskb == 0.0, jnp.float32(MASK_FILL), jnp.float32(0.0))  # (tq, N)

    for hix in range(n_heads):                      # static unroll over heads
        sl = slice(hix * hd, (hix + 1) * hd)
        # QK^T without materializing a transpose: contract the last dims.
        att = lax.dot_general(q16[:, sl], k16[:, sl],
                              (((1,), (1,)), ((), ())),
                              preferred_element_type=jnp.float32)           # (tq, N)
        att = att + bias
        att = att - jnp.max(att, axis=-1, keepdims=True)
        p = jnp.exp(att)
        inv = pl.reciprocal(jnp.sum(p, axis=-1, keepdims=True), approx=True)
        p = p * inv
        head = jnp.dot(p.astype(jnp.bfloat16), v16[:, sl],
                       preferred_element_type=jnp.float32)                  # (tq, hd)
        acc_ref[:, sl] = head                       # write straight into scratch slab

    attn_out = jnp.dot(acc_ref[...].astype(jnp.bfloat16), wproj_ref[...],
                       preferred_element_type=jnp.float32) + bproj_ref[0]
    x1 = xq + attn_out

    # ---------------- feed-forward branch: x = PreNorm(FF)(x) + x ----------------
    h2 = _layer_norm(x1, ln2_g_ref[0], ln2_b_ref[0])
    f = jnp.dot(h2.astype(jnp.bfloat16), w1_ref[...],
                preferred_element_type=jnp.float32) + b1_ref[0]
    f = _gelu_exact(f)
    f = jnp.dot(f.astype(jnp.bfloat16), w2_ref[...],
                preferred_element_type=jnp.float32) + b2_ref[0]
    o_ref[0] = x1 + f


def run_layer(x, mask, params, n_heads, *, max_q_tile=128):
    """x: (B, N, C) f32; mask: (Bm, N, N) f32, Bm in {1, B} (nonzero = attend)."""
    B, N, C = x.shape
    Bm = mask.shape[0]
    tq = N if N <= max_q_tile else max_q_tile
    nq = pl.cdiv(N, tq)

    (ln1_g, ln1_b, wqkv, bqkv, wproj, bproj,
     ln2_g, ln2_b, w1, b1, w2, b2) = params

    # Split qkv weights so K/V use the full sequence and Q only the query tile;
    # cast matmul weights to bf16 (halves DMA/VMEM, feeds the MXU bf16 path).
    wdt = jnp.bfloat16
    wq = wqkv[:, :C].astype(wdt)
    wkv = wqkv[:, C:].astype(wdt)
    bq = bqkv[:, :C]
    bkv = bqkv[:, C:]
    wproj16 = wproj.astype(wdt)
    w1_16 = w1.astype(wdt)
    w2_16 = w2.astype(wdt)

    def full_spec(arr):
        nd = arr.ndim
        return pl.BlockSpec(arr.shape, lambda b, i, _nd=nd: (0,) * _nd)

    if Bm == 1:
        mask_map = lambda b, i: (0, i, 0)
    else:
        mask_map = lambda b, i: (b, i, 0)

    in_specs = [
        pl.BlockSpec((1, tq, C), lambda b, i: (b, i, 0)),   # x query tile
        pl.BlockSpec((1, N, C), lambda b, i: (b, 0, 0)),    # x full sequence (K/V)
        pl.BlockSpec((1, tq, N), mask_map),                 # mask rows for this tile
        full_spec(ln1_g), full_spec(ln1_b),
        full_spec(wq), full_spec(bq), full_spec(wkv), full_spec(bkv),
        full_spec(wproj16), full_spec(bproj),
        full_spec(ln2_g), full_spec(ln2_b),
        full_spec(w1_16), full_spec(b1), full_spec(w2_16), full_spec(b2),
    ]

    kernel = functools.partial(transformer_layer_kernel, n_heads=n_heads)
    return pl.pallas_call(
        kernel,
        out_shape=jax.ShapeDtypeStruct((B, N, C), jnp.float32),
        grid=(B, nq),
        in_specs=in_specs,
        out_specs=pl.BlockSpec((1, tq, C), lambda b, i: (b, i, 0)),
        scratch_shapes=[pltpu.VMEM((tq, C), jnp.float32)],
        compiler_params=pltpu.CompilerParams(
            dimension_semantics=("parallel", "parallel"),
            vmem_limit_bytes=64 * 1024 * 1024,
        ),
    )(x, x, mask, ln1_g, ln1_b, wq, bq, wkv, bkv, wproj16, bproj,
      ln2_g, ln2_b, w1_16, b1, w2_16, b2)


def graph_transformer_forward(x, adj, layer_params, n_heads):
    """Full GraphTransformer forward. x: (N,C) or (B,N,C); adj: (N,N), (B,N,N) or None."""
    if x.ndim == 2:
        x = x[None]
    B, N, C = x.shape
    if adj is None:
        mask = jnp.ones((1, N, N), jnp.float32)             # shared, not broadcast to B
    elif adj.ndim == 2:
        mask = adj.astype(jnp.float32)[None]                # shared (1, N, N)
    else:
        mask = adj.astype(jnp.float32)                      # per-batch (B, N, N)
    for params in layer_params:
        x = run_layer(x, mask, params, n_heads)
    if x.shape[0] == 1:                                     # matches PyTorch squeeze
        x = x[0]
    return x


# ------------------------- pure-JAX reference (f32) -------------------------
def ref_forward(x, adj, layer_params, n_heads):
    if x.ndim == 2:
        x = x[None]
    B, N, C = x.shape
    hd = C // n_heads
    scale = hd ** -0.5
    if adj is None:
        mask = jnp.ones((B, N, N), jnp.float32)
    else:
        mask = jnp.broadcast_to((adj[None] if adj.ndim == 2 else adj).astype(jnp.float32),
                                (B, N, N))
    for (ln1_g, ln1_b, wqkv, bqkv, wproj, bproj,
         ln2_g, ln2_b, w1, b1, w2, b2) in layer_params:
        h = _layer_norm(x, ln1_g[0], ln1_b[0])
        qkv = h @ wqkv + bqkv[0]
        q, k, v = qkv[..., :C], qkv[..., C:2 * C], qkv[..., 2 * C:]
        q = q.reshape(B, N, n_heads, hd).transpose(0, 2, 1, 3)
        k = k.reshape(B, N, n_heads, hd).transpose(0, 2, 1, 3)
        v = v.reshape(B, N, n_heads, hd).transpose(0, 2, 1, 3)
        att = jnp.einsum('bhnd,bhmd->bhnm', q, k) * scale
        att = jnp.where(mask[:, None] == 0, MASK_FILL, att)
        att = jax.nn.softmax(att, axis=-1)
        o = jnp.einsum('bhnm,bhmd->bhnd', att, v).transpose(0, 2, 1, 3).reshape(B, N, C)
        x = x + o @ wproj + bproj[0]
        h2 = _layer_norm(x, ln2_g[0], ln2_b[0])
        f = _gelu_exact(h2 @ w1 + b1[0]) @ w2 + b2[0]
        x = x + f
    return x


def init_params(key, dim, depth):
    layer_params = []
    for d in range(depth):
        ks = jax.random.split(jax.random.fold_in(key, d), 6)
        ln1_g = jnp.ones((1, dim), jnp.float32)
        ln1_b = jnp.zeros((1, dim), jnp.float32)
        wqkv = 0.05 * jax.random.normal(ks[0], (dim, 3 * dim), jnp.float32)
        bqkv = 0.01 * jax.random.normal(ks[1], (1, 3 * dim), jnp.float32)
        wproj = 0.05 * jax.random.normal(ks[2], (dim, dim), jnp.float32)
        bproj = 0.01 * jax.random.normal(ks[3], (1, dim), jnp.float32)
        ln2_g = jnp.ones((1, dim), jnp.float32)
        ln2_b = jnp.zeros((1, dim), jnp.float32)
        w1 = 0.05 * jax.random.normal(ks[4], (dim, 4 * dim), jnp.float32)
        b1 = jnp.zeros((1, 4 * dim), jnp.float32)
        w2 = 0.05 * jax.random.normal(ks[5], (4 * dim, dim), jnp.float32)
        b2 = jnp.zeros((1, dim), jnp.float32)
        layer_params.append((ln1_g, ln1_b, wqkv, bqkv, wproj, bproj,
                             ln2_g, ln2_b, w1, b1, w2, b2))
    return layer_params


if __name__ == "__main__":
    B, N, dim, heads, depth = 2, 8, 32, 4, 2
    key = jax.random.PRNGKey(0)
    kx, ka, kp = jax.random.split(key, 3)

    x = jax.random.normal(kx, (B, N, dim), jnp.float32)
    # random symmetric adjacency with self-loops (2-D -> shared across batch, as in PyTorch)
    a = (jax.random.uniform(ka, (N, N)) > 0.5).astype(jnp.float32)
    adj = jnp.clip(a + a.T + jnp.eye(N, dtype=jnp.float32), 0.0, 1.0)

    params = init_params(kp, dim, depth)

    out = graph_transformer_forward(x, adj, params, heads)
    out = jax.block_until_ready(out)

    ref = ref_forward(x, adj, params, heads)
    assert out.shape == (B, N, dim)
    # tolerance relaxed vs. the f32 reference: kernel matmuls run in bf16 and the
    # softmax uses the EUP approximate reciprocal.
    assert jnp.allclose(out, ref, atol=5e-2, rtol=5e-2), \
        f"max abs diff {jnp.max(jnp.abs(out - ref))}"

    print("KERNEL_OK")
</pallas_src>

<mosaic_0001>
module attributes {stable_mosaic.version = 11 : i64} {
  func.func @transformer_layer_kernel(%arg0: i32, %arg1: i32, %arg2: memref<1x8x32xf32, #tpu.memory_space<vmem>>, %arg3: memref<1x8x32xf32, #tpu.memory_space<vmem>>, %arg4: memref<1x8x8xf32, #tpu.memory_space<vmem>>, %arg5: memref<1x32xf32, #tpu.memory_space<vmem>>, %arg6: memref<1x32xf32, #tpu.memory_space<vmem>>, %arg7: memref<32x32xbf16, #tpu.memory_space<vmem>>, %arg8: memref<1x32xf32, #tpu.memory_space<vmem>>, %arg9: memref<32x64xbf16, #tpu.memory_space<vmem>>, %arg10: memref<1x64xf32, #tpu.memory_space<vmem>>, %arg11: memref<32x32xbf16, #tpu.memory_space<vmem>>, %arg12: memref<1x32xf32, #tpu.memory_space<vmem>>, %arg13: memref<1x32xf32, #tpu.memory_space<vmem>>, %arg14: memref<1x32xf32, #tpu.memory_space<vmem>>, %arg15: memref<32x128xbf16, #tpu.memory_space<vmem>>, %arg16: memref<1x128xf32, #tpu.memory_space<vmem>>, %arg17: memref<128x32xbf16, #tpu.memory_space<vmem>>, %arg18: memref<1x32xf32, #tpu.memory_space<vmem>>, %arg19: memref<1x8x32xf32, #tpu.memory_space<vmem>>, %arg20: memref<8x32xf32, #tpu.memory_space<vmem>>) attributes {dimension_semantics = [#tpu.dimension_semantics<parallel>, #tpu.dimension_semantics<parallel>], iteration_bounds = array<i64: 2, 1>, scalar_prefetch = 0 : i64, scratch_operands = 1 : i64, tpu.core_type = #tpu.core_type<tc>, window_params = [{transform_indices = @transform_0, window_bounds = array<i64: 1, 8, 32>}, {transform_indices = @transform_1, window_bounds = array<i64: 1, 8, 32>}, {transform_indices = @transform_2, window_bounds = array<i64: 1, 8, 8>}, {pipeline_mode = #tpu.pipeline_mode<synchronous>, transform_indices = @transform_3, window_bounds = array<i64: 1, 32>}, {pipeline_mode = #tpu.pipeline_mode<synchronous>, transform_indices = @transform_4, window_bounds = array<i64: 1, 32>}, {pipeline_mode = #tpu.pipeline_mode<synchronous>, transform_indices = @transform_5, window_bounds = array<i64: 32, 32>}, {pipeline_mode = #tpu.pipeline_mode<synchronous>, transform_indices = @transform_6, window_bounds = array<i64: 1, 32>}, {pipeline_mode = #tpu.pipeline_mode<synchronous>, transform_indices = @transform_7, window_bounds = array<i64: 32, 64>}, {pipeline_mode = #tpu.pipeline_mode<synchronous>, transform_indices = @transform_8, window_bounds = array<i64: 1, 64>}, {pipeline_mode = #tpu.pipeline_mode<synchronous>, transform_indices = @transform_9, window_bounds = array<i64: 32, 32>}, {pipeline_mode = #tpu.pipeline_mode<synchronous>, transform_indices = @transform_10, window_bounds = array<i64: 1, 32>}, {pipeline_mode = #tpu.pipeline_mode<synchronous>, transform_indices = @transform_11, window_bounds = array<i64: 1, 32>}, {pipeline_mode = #tpu.pipeline_mode<synchronous>, transform_indices = @transform_12, window_bounds = array<i64: 1, 32>}, {pipeline_mode = #tpu.pipeline_mode<synchronous>, transform_indices = @transform_13, window_bounds = array<i64: 32, 128>}, {pipeline_mode = #tpu.pipeline_mode<synchronous>, transform_indices = @transform_14, window_bounds = array<i64: 1, 128>}, {pipeline_mode = #tpu.pipeline_mode<synchronous>, transform_indices = @transform_15, window_bounds = array<i64: 128, 32>}, {pipeline_mode = #tpu.pipeline_mode<synchronous>, transform_indices = @transform_16, window_bounds = array<i64: 1, 32>}, {transform_indices = @transform_17, window_bounds = array<i64: 1, 8, 32>}]} {
    %c0 = arith.constant 0 : index
    %c0_0 = arith.constant 0 : index
    %c0_1 = arith.constant 0 : index
    %0 = vector.load %arg2[%c0, %c0_0, %c0_1] : memref<1x8x32xf32, #tpu.memory_space<vmem>>, vector<1x8x32xf32>
    %1 = vector.shape_cast %0 : vector<1x8x32xf32> to vector<8x32xf32>
    %c0_2 = arith.constant 0 : index
    %c0_3 = arith.constant 0 : index
    %c0_4 = arith.constant 0 : index
    %2 = vector.load %arg3[%c0_2, %c0_3, %c0_4] : memref<1x8x32xf32, #tpu.memory_space<vmem>>, vector<1x8x32xf32>
    %3 = vector.shape_cast %2 : vector<1x8x32xf32> to vector<8x32xf32>
    %c0_5 = arith.constant 0 : index
    %c0_6 = arith.constant 0 : index
    %c0_7 = arith.constant 0 : index
    %4 = vector.load %arg4[%c0_5, %c0_6, %c0_7] : memref<1x8x8xf32, #tpu.memory_space<vmem>>, vector<1x8x8xf32>
    %5 = vector.shape_cast %4 : vector<1x8x8xf32> to vector<8x8xf32>
    %c0_8 = arith.constant 0 : index
    %c0_9 = arith.constant 0 : index
    %6 = vector.load %arg5[%c0_8, %c0_9] : memref<1x32xf32, #tpu.memory_space<vmem>>, vector<1x32xf32>
    %7 = vector.shape_cast %6 : vector<1x32xf32> to vector<32xf32>
    %c0_10 = arith.constant 0 : index
    %c0_11 = arith.constant 0 : index
    %8 = vector.load %arg6[%c0_10, %c0_11] : memref<1x32xf32, #tpu.memory_space<vmem>>, vector<1x32xf32>
    %9 = vector.shape_cast %8 : vector<1x32xf32> to vector<32xf32>
    %cst = arith.constant dense<0.000000e+00> : vector<8xf32>
    %10 = vector.multi_reduction <add>, %1, %cst [1] : vector<8x32xf32> to vector<8xf32>
    %11 = vector.shape_cast %10 : vector<8xf32> to vector<8x1xf32>
    %cst_12 = arith.constant 3.200000e+01 : f32
    %12 = vector.broadcast %cst_12 : f32 to vector<8x1xf32>
    %13 = arith.divf %11, %12 : vector<8x1xf32>
    %14 = vector.broadcast %13 : vector<8x1xf32> to vector<8x32xf32>
    %15 = arith.subf %1, %14 : vector<8x32xf32>
    %16 = arith.mulf %15, %15 : vector<8x32xf32>
    %cst_13 = arith.constant dense<0.000000e+00> : vector<8xf32>
    %17 = vector.multi_reduction <add>, %16, %cst_13 [1] : vector<8x32xf32> to vector<8xf32>
    %18 = vector.shape_cast %17 : vector<8xf32> to vector<8x1xf32>
    %cst_14 = arith.constant 3.200000e+01 : f32
    %19 = vector.broadcast %cst_14 : f32 to vector<8x1xf32>
    %20 = arith.divf %18, %19 : vector<8x1xf32>
    %21 = vector.broadcast %13 : vector<8x1xf32> to vector<8x32xf32>
    %22 = arith.subf %1, %21 : vector<8x32xf32>
    %cst_15 = arith.constant 9.99999974E-6 : f32
    %23 = vector.broadcast %cst_15 : f32 to vector<8x1xf32>
    %24 = arith.addf %20, %23 : vector<8x1xf32>
    %25 = math.rsqrt %24 : vector<8x1xf32>
    %26 = vector.broadcast %25 : vector<8x1xf32> to vector<8x32xf32>
    %27 = arith.mulf %22, %26 : vector<8x32xf32>
    %28 = vector.shape_cast %7 : vector<32xf32> to vector<1x32xf32>
    %29 = vector.broadcast %28 : vector<1x32xf32> to vector<8x32xf32>
    %30 = arith.mulf %27, %29 : vector<8x32xf32>
    %31 = vector.shape_cast %9 : vector<32xf32> to vector<1x32xf32>
    %32 = vector.broadcast %31 : vector<1x32xf32> to vector<8x32xf32>
    %33 = arith.addf %30, %32 : vector<8x32xf32>
    %cst_16 = arith.constant dense<0.000000e+00> : vector<8xf32>
    %34 = vector.multi_reduction <add>, %3, %cst_16 [1] : vector<8x32xf32> to vector<8xf32>
    %35 = vector.shape_cast %34 : vector<8xf32> to vector<8x1xf32>
    %cst_17 = arith.constant 3.200000e+01 : f32
    %36 = vector.broadcast %cst_17 : f32 to vector<8x1xf32>
    %37 = arith.divf %35, %36 : vector<8x1xf32>
    %38 = vector.broadcast %37 : vector<8x1xf32> to vector<8x32xf32>
    %39 = arith.subf %3, %38 : vector<8x32xf32>
    %40 = arith.mulf %39, %39 : vector<8x32xf32>
    %cst_18 = arith.constant dense<0.000000e+00> : vector<8xf32>
    %41 = vector.multi_reduction <add>, %40, %cst_18 [1] : vector<8x32xf32> to vector<8xf32>
    %42 = vector.shape_cast %41 : vector<8xf32> to vector<8x1xf32>
    %cst_19 = arith.constant 3.200000e+01 : f32
    %43 = vector.broadcast %cst_19 : f32 to vector<8x1xf32>
    %44 = arith.divf %42, %43 : vector<8x1xf32>
    %45 = vector.broadcast %37 : vector<8x1xf32> to vector<8x32xf32>
    %46 = arith.subf %3, %45 : vector<8x32xf32>
    %cst_20 = arith.constant 9.99999974E-6 : f32
    %47 = vector.broadcast %cst_20 : f32 to vector<8x1xf32>
    %48 = arith.addf %44, %47 : vector<8x1xf32>
    %49 = math.rsqrt %48 : vector<8x1xf32>
    %50 = vector.broadcast %49 : vector<8x1xf32> to vector<8x32xf32>
    %51 = arith.mulf %46, %50 : vector<8x32xf32>
    %52 = vector.shape_cast %7 : vector<32xf32> to vector<1x32xf32>
    %53 = vector.broadcast %52 : vector<1x32xf32> to vector<8x32xf32>
    %54 = arith.mulf %51, %53 : vector<8x32xf32>
    %55 = vector.shape_cast %9 : vector<32xf32> to vector<1x32xf32>
    %56 = vector.broadcast %55 : vector<1x32xf32> to vector<8x32xf32>
    %57 = arith.addf %54, %56 : vector<8x32xf32>
    %58 = arith.truncf %33 : vector<8x32xf32> to vector<8x32xbf16>
    %c0_21 = arith.constant 0 : index
    %c0_22 = arith.constant 0 : index
    %59 = vector.load %arg7[%c0_21, %c0_22] : memref<32x32xbf16, #tpu.memory_space<vmem>>, vector<32x32xbf16>
    %cst_23 = arith.constant dense<0.000000e+00> : vector<8x32xf32>
    %60 = tpu.matmul %58, %59, %cst_23 {dimension_numbers = #tpu.dot_dimension_numbers<[1], [0], [0], [1], [0, 0, 1, 1], [], []>} : vector<8x32xbf16>, vector<32x32xbf16>, vector<8x32xf32> -> vector<8x32xf32>
    %c0_24 = arith.constant 0 : index
    %c0_25 = arith.constant 0 : index
    %61 = vector.load %arg8[%c0_24, %c0_25] : memref<1x32xf32, #tpu.memory_space<vmem>>, vector<1x32xf32>
    %62 = vector.shape_cast %61 : vector<1x32xf32> to vector<32xf32>
    %63 = vector.shape_cast %62 : vector<32xf32> to vector<1x32xf32>
    %64 = vector.broadcast %63 : vector<1x32xf32> to vector<8x32xf32>
    %65 = arith.addf %60, %64 : vector<8x32xf32>
    %cst_26 = arith.constant 0.353553385 : f32
    %66 = vector.broadcast %cst_26 : f32 to vector<8x32xf32>
    %67 = arith.mulf %65, %66 : vector<8x32xf32>
    %68 = arith.truncf %57 : vector<8x32xf32> to vector<8x32xbf16>
    %c0_27 = arith.constant 0 : index
    %c0_28 = arith.constant 0 : index
    %69 = vector.load %arg9[%c0_27, %c0_28] : memref<32x64xbf16, #tpu.memory_space<vmem>>, vector<32x64xbf16>
    %cst_29 = arith.constant dense<0.000000e+00> : vector<8x64xf32>
    %70 = tpu.matmul %68, %69, %cst_29 {dimension_numbers = #tpu.dot_dimension_numbers<[1], [0], [0], [1], [0, 0, 1, 1], [], []>} : vector<8x32xbf16>, vector<32x64xbf16>, vector<8x64xf32> -> vector<8x64xf32>
    %c0_30 = arith.constant 0 : index
    %c0_31 = arith.constant 0 : index
    %71 = vector.load %arg10[%c0_30, %c0_31] : memref<1x64xf32, #tpu.memory_space<vmem>>, vector<1x64xf32>
    %72 = vector.shape_cast %71 : vector<1x64xf32> to vector<64xf32>
    %73 = vector.shape_cast %72 : vector<64xf32> to vector<1x64xf32>
    %74 = vector.broadcast %73 : vector<1x64xf32> to vector<8x64xf32>
    %75 = arith.addf %70, %74 : vector<8x64xf32>
    %76 = arith.truncf %67 : vector<8x32xf32> to vector<8x32xbf16>
    %77 = vector.extract_strided_slice %75 {offsets = [0, 0], sizes = [8, 32], strides = [1, 1]} : vector<8x64xf32> to vector<8x32xf32>
    %78 = arith.truncf %77 : vector<8x32xf32> to vector<8x32xbf16>
    %79 = vector.extract_strided_slice %75 {offsets = [0, 32], sizes = [8, 32], strides = [1, 1]} : vector<8x64xf32> to vector<8x32xf32>
    %80 = arith.truncf %79 : vector<8x32xf32> to vector<8x32xbf16>
    %cst_32 = arith.constant 0.000000e+00 : f32
    %81 = vector.broadcast %cst_32 : f32 to vector<8x8xf32>
    %82 = arith.cmpf oeq, %5, %81 : vector<8x8xf32>
    %cst_33 = arith.constant -1.000000e+09 : f32
    %cst_34 = arith.constant 0.000000e+00 : f32
    %83 = vector.broadcast %cst_33 : f32 to vector<8x8xf32>
    %84 = vector.broadcast %cst_34 : f32 to vector<8x8xf32>
    %85 = arith.select %82, %83, %84 : vector<8x8xi1>, vector<8x8xf32>
    %86 = vector.extract_strided_slice %76 {offsets = [0, 0], sizes = [8, 8], strides = [1, 1]} : vector<8x32xbf16> to vector<8x8xbf16>
    %87 = vector.extract_strided_slice %78 {offsets = [0, 0], sizes = [8, 8], strides = [1, 1]} : vector<8x32xbf16> to vector<8x8xbf16>
    %cst_35 = arith.constant dense<0.000000e+00> : vector<8x8xf32>
    %88 = tpu.matmul %86, %87, %cst_35 {dimension_numbers = #tpu.dot_dimension_numbers<[1], [1], [0], [0], [0, 0, 1, 0], [], []>} : vector<8x8xbf16>, vector<8x8xbf16>, vector<8x8xf32> -> vector<8x8xf32>
    %89 = arith.addf %88, %85 : vector<8x8xf32>
    %cst_36 = arith.constant dense<0xFF800000> : vector<8xf32>
    %90 = vector.multi_reduction <maximumf>, %89, %cst_36 [1] : vector<8x8xf32> to vector<8xf32>
    %91 = vector.shape_cast %90 : vector<8xf32> to vector<8x1xf32>
    %92 = vector.broadcast %91 : vector<8x1xf32> to vector<8x8xf32>
    %93 = arith.subf %89, %92 : vector<8x8xf32>
    %94 = math.exp %93 : vector<8x8xf32>
    %cst_37 = arith.constant dense<0.000000e+00> : vector<8xf32>
    %95 = vector.multi_reduction <add>, %94, %cst_37 [1] : vector<8x8xf32> to vector<8xf32>
    %96 = vector.shape_cast %95 : vector<8xf32> to vector<8x1xf32>
    %97 = tpu.reciprocal %96 {approx = true} : vector<8x1xf32> -> vector<8x1xf32>
    %98 = vector.broadcast %97 : vector<8x1xf32> to vector<8x8xf32>
    %99 = arith.mulf %94, %98 : vector<8x8xf32>
    %100 = arith.truncf %99 : vector<8x8xf32> to vector<8x8xbf16>
    %101 = vector.extract_strided_slice %80 {offsets = [0, 0], sizes = [8, 8], strides = [1, 1]} : vector<8x32xbf16> to vector<8x8xbf16>
    %cst_38 = arith.constant dense<0.000000e+00> : vector<8x8xf32>
    %102 = tpu.matmul %100, %101, %cst_38 {dimension_numbers = #tpu.dot_dimension_numbers<[1], [0], [0], [1], [0, 0, 1, 1], [], []>} : vector<8x8xbf16>, vector<8x8xbf16>, vector<8x8xf32> -> vector<8x8xf32>
    %c0_39 = arith.constant 0 : index
    %c0_40 = arith.constant 0 : index
    %103 = vector.load %arg20[%c0_39, %c0_40] : memref<8x32xf32, #tpu.memory_space<vmem>>, vector<8x8xf32>
    tpu.vector_store %arg20[%c0_39, %c0_40], %102 {strides = array<i32>} : memref<8x32xf32, #tpu.memory_space<vmem>>, vector<8x8xf32>,
    %104 = vector.extract_strided_slice %76 {offsets = [0, 8], sizes = [8, 8], strides = [1, 1]} : vector<8x32xbf16> to vector<8x8xbf16>
    %105 = vector.extract_strided_slice %78 {offsets = [0, 8], sizes = [8, 8], strides = [1, 1]} : vector<8x32xbf16> to vector<8x8xbf16>
    %cst_41 = arith.constant dense<0.000000e+00> : vector<8x8xf32>
    %106 = tpu.matmul %104, %105, %cst_41 {dimension_numbers = #tpu.dot_dimension_numbers<[1], [1], [0], [0], [0, 0, 1, 0], [], []>} : vector<8x8xbf16>, vector<8x8xbf16>, vector<8x8xf32> -> vector<8x8xf32>
    %107 = arith.addf %106, %85 : vector<8x8xf32>
    %cst_42 = arith.constant dense<0xFF800000> : vector<8xf32>
    %108 = vector.multi_reduction <maximumf>, %107, %cst_42 [1] : vector<8x8xf32> to vector<8xf32>
    %109 = vector.shape_cast %108 : vector<8xf32> to vector<8x1xf32>
    %110 = vector.broadcast %109 : vector<8x1xf32> to vector<8x8xf32>
    %111 = arith.subf %107, %110 : vector<8x8xf32>
    %112 = math.exp %111 : vector<8x8xf32>
    %cst_43 = arith.constant dense<0.000000e+00> : vector<8xf32>
    %113 = vector.multi_reduction <add>, %112, %cst_43 [1] : vector<8x8xf32> to vector<8xf32>
    %114 = vector.shape_cast %113 : vector<8xf32> to vector<8x1xf32>
    %115 = tpu.reciprocal %114 {approx = true} : vector<8x1xf32> -> vector<8x1xf32>
    %116 = vector.broadcast %115 : vector<8x1xf32> to vector<8x8xf32>
    %117 = arith.mulf %112, %116 : vector<8x8xf32>
    %118 = arith.truncf %117 : vector<8x8xf32> to vector<8x8xbf16>
    %119 = vector.extract_strided_slice %80 {offsets = [0, 8], sizes = [8, 8], strides = [1, 1]} : vector<8x32xbf16> to vector<8x8xbf16>
    %cst_44 = arith.constant dense<0.000000e+00> : vector<8x8xf32>
    %120 = tpu.matmul %118, %119, %cst_44 {dimension_numbers = #tpu.dot_dimension_numbers<[1], [0], [0], [1], [0, 0, 1, 1], [], []>} : vector<8x8xbf16>, vector<8x8xbf16>, vector<8x8xf32> -> vector<8x8xf32>
    %c0_45 = arith.constant 0 : index
    %c8 = arith.constant 8 : index
    %121 = vector.load %arg20[%c0_45, %c8] : memref<8x32xf32, #tpu.memory_space<vmem>>, vector<8x8xf32>
    tpu.vector_store %arg20[%c0_45, %c8], %120 {strides = array<i32>} : memref<8x32xf32, #tpu.memory_space<vmem>>, vector<8x8xf32>,
    %122 = vector.extract_strided_slice %76 {offsets = [0, 16], sizes = [8, 8], strides = [1, 1]} : vector<8x32xbf16> to vector<8x8xbf16>
    %123 = vector.extract_strided_slice %78 {offsets = [0, 16], sizes = [8, 8], strides = [1, 1]} : vector<8x32xbf16> to vector<8x8xbf16>
    %cst_46 = arith.constant dense<0.000000e+00> : vector<8x8xf32>
    %124 = tpu.matmul %122, %123, %cst_46 {dimension_numbers = #tpu.dot_dimension_numbers<[1], [1], [0], [0], [0, 0, 1, 0], [], []>} : vector<8x8xbf16>, vector<8x8xbf16>, vector<8x8xf32> -> vector<8x8xf32>
    %125 = arith.addf %124, %85 : vector<8x8xf32>
    %cst_47 = arith.constant dense<0xFF800000> : vector<8xf32>
    %126 = vector.multi_reduction <maximumf>, %125, %cst_47 [1] : vector<8x8xf32> to vector<8xf32>
    %127 = vector.shape_cast %126 : vector<8xf32> to vector<8x1xf32>
    %128 = vector.broadcast %127 : vector<8x1xf32> to vector<8x8xf32>
    %129 = arith.subf %125, %128 : vector<8x8xf32>
    %130 = math.exp %129 : vector<8x8xf32>
    %cst_48 = arith.constant dense<0.000000e+00> : vector<8xf32>
    %131 = vector.multi_reduction <add>, %130, %cst_48 [1] : vector<8x8xf32> to vector<8xf32>
    %132 = vector.shape_cast %131 : vector<8xf32> to vector<8x1xf32>
    %133 = tpu.reciprocal %132 {approx = true} : vector<8x1xf32> -> vector<8x1xf32>
    %134 = vector.broadcast %133 : vector<8x1xf32> to vector<8x8xf32>
    %135 = arith.mulf %130, %134 : vector<8x8xf32>
    %136 = arith.truncf %135 : vector<8x8xf32> to vector<8x8xbf16>
    %137 = vector.extract_strided_slice %80 {offsets = [0, 16], sizes = [8, 8], strides = [1, 1]} : vector<8x32xbf16> to vector<8x8xbf16>
    %cst_49 = arith.constant dense<0.000000e+00> : vector<8x8xf32>
    %138 = tpu.matmul %136, %137, %cst_49 {dimension_numbers = #tpu.dot_dimension_numbers<[1], [0], [0], [1], [0, 0, 1, 1], [], []>} : vector<8x8xbf16>, vector<8x8xbf16>, vector<8x8xf32> -> vector<8x8xf32>
    %c0_50 = arith.constant 0 : index
    %c16 = arith.constant 16 : index
    %139 = vector.load %arg20[%c0_50, %c16] : memref<8x32xf32, #tpu.memory_space<vmem>>, vector<8x8xf32>
    tpu.vector_store %arg20[%c0_50, %c16], %138 {strides = array<i32>} : memref<8x32xf32, #tpu.memory_space<vmem>>, vector<8x8xf32>,
    %140 = vector.extract_strided_slice %76 {offsets = [0, 24], sizes = [8, 8], strides = [1, 1]} : vector<8x32xbf16> to vector<8x8xbf16>
    %141 = vector.extract_strided_slice %78 {offsets = [0, 24], sizes = [8, 8], strides = [1, 1]} : vector<8x32xbf16> to vector<8x8xbf16>
    %cst_51 = arith.constant dense<0.000000e+00> : vector<8x8xf32>
    %142 = tpu.matmul %140, %141, %cst_51 {dimension_numbers = #tpu.dot_dimension_numbers<[1], [1], [0], [0], [0, 0, 1, 0], [], []>} : vector<8x8xbf16>, vector<8x8xbf16>, vector<8x8xf32> -> vector<8x8xf32>
    %143 = arith.addf %142, %85 : vector<8x8xf32>
    %cst_52 = arith.constant dense<0xFF800000> : vector<8xf32>
    %144 = vector.multi_reduction <maximumf>, %143, %cst_52 [1] : vector<8x8xf32> to vector<8xf32>
    %145 = vector.shape_cast %144 : vector<8xf32> to vector<8x1xf32>
    %146 = vector.broadcast %145 : vector<8x1xf32> to vector<8x8xf32>
    %147 = arith.subf %143, %146 : vector<8x8xf32>
    %148 = math.exp %147 : vector<8x8xf32>
    %cst_53 = arith.constant dense<0.000000e+00> : vector<8xf32>
    %149 = vector.multi_reduction <add>, %148, %cst_53 [1] : vector<8x8xf32> to vector<8xf32>
    %150 = vector.shape_cast %149 : vector<8xf32> to vector<8x1xf32>
    %151 = tpu.reciprocal %150 {approx = true} : vector<8x1xf32> -> vector<8x1xf32>
    %152 = vector.broadcast %151 : vector<8x1xf32> to vector<8x8xf32>
    %153 = arith.mulf %148, %152 : vector<8x8xf32>
    %154 = arith.truncf %153 : vector<8x8xf32> to vector<8x8xbf16>
    %155 = vector.extract_strided_slice %80 {offsets = [0, 24], sizes = [8, 8], strides = [1, 1]} : vector<8x32xbf16> to vector<8x8xbf16>
    %cst_54 = arith.constant dense<0.000000e+00> : vector<8x8xf32>
    %156 = tpu.matmul %154, %155, %cst_54 {dimension_numbers = #tpu.dot_dimension_numbers<[1], [0], [0], [1], [0, 0, 1, 1], [], []>} : vector<8x8xbf16>, vector<8x8xbf16>, vector<8x8xf32> -> vector<8x8xf32>
    %c0_55 = arith.constant 0 : index
    %c24 = arith.constant 24 : index
    %157 = vector.load %arg20[%c0_55, %c24] : memref<8x32xf32, #tpu.memory_space<vmem>>, vector<8x8xf32>
    tpu.vector_store %arg20[%c0_55, %c24], %156 {strides = array<i32>} : memref<8x32xf32, #tpu.memory_space<vmem>>, vector<8x8xf32>,
    %c0_56 = arith.constant 0 : index
    %c0_57 = arith.constant 0 : index
    %158 = vector.load %arg20[%c0_56, %c0_57] : memref<8x32xf32, #tpu.memory_space<vmem>>, vector<8x32xf32>
    %159 = arith.truncf %158 : vector<8x32xf32> to vector<8x32xbf16>
    %c0_58 = arith.constant 0 : index
    %c0_59 = arith.constant 0 : index
    %160 = vector.load %arg11[%c0_58, %c0_59] : memref<32x32xbf16, #tpu.memory_space<vmem>>, vector<32x32xbf16>
    %cst_60 = arith.constant dense<0.000000e+00> : vector<8x32xf32>
    %161 = tpu.matmul %159, %160, %cst_60 {dimension_numbers = #tpu.dot_dimension_numbers<[1], [0], [0], [1], [0, 0, 1, 1], [], []>} : vector<8x32xbf16>, vector<32x32xbf16>, vector<8x32xf32> -> vector<8x32xf32>
    %c0_61 = arith.constant 0 : index
    %c0_62 = arith.constant 0 : index
    %162 = vector.load %arg12[%c0_61, %c0_62] : memref<1x32xf32, #tpu.memory_space<vmem>>, vector<1x32xf32>
    %163 = vector.shape_cast %162 : vector<1x32xf32> to vector<32xf32>
    %164 = vector.shape_cast %163 : vector<32xf32> to vector<1x32xf32>
    %165 = vector.broadcast %164 : vector<1x32xf32> to vector<8x32xf32>
    %166 = arith.addf %161, %165 : vector<8x32xf32>
    %167 = arith.addf %1, %166 : vector<8x32xf32>
    %c0_63 = arith.constant 0 : index
    %c0_64 = arith.constant 0 : index
    %168 = vector.load %arg13[%c0_63, %c0_64] : memref<1x32xf32, #tpu.memory_space<vmem>>, vector<1x32xf32>
    %169 = vector.shape_cast %168 : vector<1x32xf32> to vector<32xf32>
    %c0_65 = arith.constant 0 : index
    %c0_66 = arith.constant 0 : index
    %170 = vector.load %arg14[%c0_65, %c0_66] : memref<1x32xf32, #tpu.memory_space<vmem>>, vector<1x32xf32>
    %171 = vector.shape_cast %170 : vector<1x32xf32> to vector<32xf32>
    %cst_67 = arith.constant dense<0.000000e+00> : vector<8xf32>
    %172 = vector.multi_reduction <add>, %167, %cst_67 [1] : vector<8x32xf32> to vector<8xf32>
    %173 = vector.shape_cast %172 : vector<8xf32> to vector<8x1xf32>
    %cst_68 = arith.constant 3.200000e+01 : f32
    %174 = vector.broadcast %cst_68 : f32 to vector<8x1xf32>
    %175 = arith.divf %173, %174 : vector<8x1xf32>
    %176 = vector.broadcast %175 : vector<8x1xf32> to vector<8x32xf32>
    %177 = arith.subf %167, %176 : vector<8x32xf32>
    %178 = arith.mulf %177, %177 : vector<8x32xf32>
    %cst_69 = arith.constant dense<0.000000e+00> : vector<8xf32>
    %179 = vector.multi_reduction <add>, %178, %cst_69 [1] : vector<8x32xf32> to vector<8xf32>
    %180 = vector.shape_cast %179 : vector<8xf32> to vector<8x1xf32>
    %cst_70 = arith.constant 3.200000e+01 : f32
    %181 = vector.broadcast %cst_70 : f32 to vector<8x1xf32>
    %182 = arith.divf %180, %181 : vector<8x1xf32>
    %183 = vector.broadcast %175 : vector<8x1xf32> to vector<8x32xf32>
    %184 = arith.subf %167, %183 : vector<8x32xf32>
    %cst_71 = arith.constant 9.99999974E-6 : f32
    %185 = vector.broadcast %cst_71 : f32 to vector<8x1xf32>
    %186 = arith.addf %182, %185 : vector<8x1xf32>
    %187 = math.rsqrt %186 : vector<8x1xf32>
    %188 = vector.broadcast %187 : vector<8x1xf32> to vector<8x32xf32>
    %189 = arith.mulf %184, %188 : vector<8x32xf32>
    %190 = vector.shape_cast %169 : vector<32xf32> to vector<1x32xf32>
    %191 = vector.broadcast %190 : vector<1x32xf32> to vector<8x32xf32>
    %192 = arith.mulf %189, %191 : vector<8x32xf32>
    %193 = vector.shape_cast %171 : vector<32xf32> to vector<1x32xf32>
    %194 = vector.broadcast %193 : vector<1x32xf32> to vector<8x32xf32>
    %195 = arith.addf %192, %194 : vector<8x32xf32>
    %196 = arith.truncf %195 : vector<8x32xf32> to vector<8x32xbf16>
    %c0_72 = arith.constant 0 : index
    %c0_73 = arith.constant 0 : index
    %197 = vector.load %arg15[%c0_72, %c0_73] : memref<32x128xbf16, #tpu.memory_space<vmem>>, vector<32x128xbf16>
    %cst_74 = arith.constant dense<0.000000e+00> : vector<8x128xf32>
    %198 = tpu.matmul %196, %197, %cst_74 {dimension_numbers = #tpu.dot_dimension_numbers<[1], [0], [0], [1], [0, 0, 1, 1], [], []>} : vector<8x32xbf16>, vector<32x128xbf16>, vector<8x128xf32> -> vector<8x128xf32>
    %c0_75 = arith.constant 0 : index
    %c0_76 = arith.constant 0 : index
    %199 = vector.load %arg16[%c0_75, %c0_76] : memref<1x128xf32, #tpu.memory_space<vmem>>, vector<1x128xf32>
    %200 = vector.shape_cast %199 : vector<1x128xf32> to vector<128xf32>
    %201 = vector.shape_cast %200 : vector<128xf32> to vector<1x128xf32>
    %202 = vector.broadcast %201 : vector<1x128xf32> to vector<8x128xf32>
    %203 = arith.addf %198, %202 : vector<8x128xf32>
    %cst_77 = arith.constant 5.000000e-01 : f32
    %204 = vector.broadcast %cst_77 : f32 to vector<8x128xf32>
    %205 = arith.mulf %204, %203 : vector<8x128xf32>
    %cst_78 = arith.constant 0.707106769 : f32
    %206 = vector.broadcast %cst_78 : f32 to vector<8x128xf32>
    %207 = arith.mulf %203, %206 : vector<8x128xf32>
    %208 = math.erf %207 : vector<8x128xf32>
    %cst_79 = arith.constant 1.000000e+00 : f32
    %209 = vector.broadcast %cst_79 : f32 to vector<8x128xf32>
    %210 = arith.addf %209, %208 : vector<8x128xf32>
    %211 = arith.mulf %205, %210 : vector<8x128xf32>
    %212 = arith.truncf %211 : vector<8x128xf32> to vector<8x128xbf16>
    %c0_80 = arith.constant 0 : index
    %c0_81 = arith.constant 0 : index
    %213 = vector.load %arg17[%c0_80, %c0_81] : memref<128x32xbf16, #tpu.memory_space<vmem>>, vector<128x32xbf16>
    %cst_82 = arith.constant dense<0.000000e+00> : vector<8x32xf32>
    %214 = tpu.matmul %212, %213, %cst_82 {dimension_numbers = #tpu.dot_dimension_numbers<[1], [0], [0], [1], [0, 0, 1, 1], [], []>} : vector<8x128xbf16>, vector<128x32xbf16>, vector<8x32xf32> -> vector<8x32xf32>
    %c0_83 = arith.constant 0 : index
    %c0_84 = arith.constant 0 : index
    %215 = vector.load %arg18[%c0_83, %c0_84] : memref<1x32xf32, #tpu.memory_space<vmem>>, vector<1x32xf32>
    %216 = vector.shape_cast %215 : vector<1x32xf32> to vector<32xf32>
    %217 = vector.shape_cast %216 : vector<32xf32> to vector<1x32xf32>
    %218 = vector.broadcast %217 : vector<1x32xf32> to vector<8x32xf32>
    %219 = arith.addf %214, %218 : vector<8x32xf32>
    %220 = arith.addf %167, %219 : vector<8x32xf32>
    %c0_85 = arith.constant 0 : index
    %c0_86 = arith.constant 0 : index
    %c0_87 = arith.constant 0 : index
    %221 = vector.load %arg19[%c0_85, %c0_86, %c0_87] : memref<1x8x32xf32, #tpu.memory_space<vmem>>, vector<1x8x32xf32>
    %222 = vector.shape_cast %221 : vector<1x8x32xf32> to vector<8x32xf32>
    %223 = vector.shape_cast %220 : vector<8x32xf32> to vector<1x8x32xf32>
    tpu.vector_store %arg19[%c0_85, %c0_86, %c0_87], %223 {strides = array<i32>} : memref<1x8x32xf32, #tpu.memory_space<vmem>>, vector<1x8x32xf32>,
    return
  }
  func.func @transform_0(%arg0: i32, %arg1: i32) -> (i32, i32, i32) {
    %c0_i32 = arith.constant 0 : i32
    %c0_i32_0 = arith.constant 0 : i32
    return %arg0, %arg1, %c0_i32 : i32, i32, i32
  }
  func.func @transform_1(%arg0: i32, %arg1: i32) -> (i32, i32, i32) {
    %c0_i32 = arith.constant 0 : i32
    %c0_i32_0 = arith.constant 0 : i32
    %c0_i32_1 = arith.constant 0 : i32
    return %arg0, %c0_i32, %c0_i32_0 : i32, i32, i32
  }
  func.func @transform_2(%arg0: i32, %arg1: i32) -> (i32, i32, i32) {
    %c0_i32 = arith.constant 0 : i32
    %c0_i32_0 = arith.constant 0 : i32
    %c0_i32_1 = arith.constant 0 : i32
    return %c0_i32, %arg1, %c0_i32_0 : i32, i32, i32
  }
  func.func @transform_3(%arg0: i32, %arg1: i32) -> (i32, i32) {
    %c0_i32 = arith.constant 0 : i32
    %c0_i32_0 = arith.constant 0 : i32
    %c0_i32_1 = arith.constant 0 : i32
    return %c0_i32, %c0_i32_0 : i32, i32
  }
  func.func @transform_4(%arg0: i32, %arg1: i32) -> (i32, i32) {
    %c0_i32 = arith.constant 0 : i32
    %c0_i32_0 = arith.constant 0 : i32
    %c0_i32_1 = arith.constant 0 : i32
    return %c0_i32, %c0_i32_0 : i32, i32
  }
  func.func @transform_5(%arg0: i32, %arg1: i32) -> (i32, i32) {
    %c0_i32 = arith.constant 0 : i32
    %c0_i32_0 = arith.constant 0 : i32
    %c0_i32_1 = arith.constant 0 : i32
    return %c0_i32, %c0_i32_0 : i32, i32
  }
  func.func @transform_6(%arg0: i32, %arg1: i32) -> (i32, i32) {
    %c0_i32 = arith.constant 0 : i32
    %c0_i32_0 = arith.constant 0 : i32
    %c0_i32_1 = arith.constant 0 : i32
    return %c0_i32, %c0_i32_0 : i32, i32
  }
  func.func @transform_7(%arg0: i32, %arg1: i32) -> (i32, i32) {
    %c0_i32 = arith.constant 0 : i32
    %c0_i32_0 = arith.constant 0 : i32
    %c0_i32_1 = arith.constant 0 : i32
    return %c0_i32, %c0_i32_0 : i32, i32
  }
  func.func @transform_8(%arg0: i32, %arg1: i32) -> (i32, i32) {
    %c0_i32 = arith.constant 0 : i32
    %c0_i32_0 = arith.constant 0 : i32
    %c0_i32_1 = arith.constant 0 : i32
    return %c0_i32, %c0_i32_0 : i32, i32
  }
  func.func @transform_9(%arg0: i32, %arg1: i32) -> (i32, i32) {
    %c0_i32 = arith.constant 0 : i32
    %c0_i32_0 = arith.constant 0 : i32
    %c0_i32_1 = arith.constant 0 : i32
    return %c0_i32, %c0_i32_0 : i32, i32
  }
  func.func @transform_10(%arg0: i32, %arg1: i32) -> (i32, i32) {
    %c0_i32 = arith.constant 0 : i32
    %c0_i32_0 = arith.constant 0 : i32
    %c0_i32_1 = arith.constant 0 : i32
    return %c0_i32, %c0_i32_0 : i32, i32
  }
  func.func @transform_11(%arg0: i32, %arg1: i32) -> (i32, i32) {
    %c0_i32 = arith.constant 0 : i32
    %c0_i32_0 = arith.constant 0 : i32
    %c0_i32_1 = arith.constant 0 : i32
    return %c0_i32, %c0_i32_0 : i32, i32
  }
  func.func @transform_12(%arg0: i32, %arg1: i32) -> (i32, i32) {
    %c0_i32 = arith.constant 0 : i32
    %c0_i32_0 = arith.constant 0 : i32
    %c0_i32_1 = arith.constant 0 : i32
    return %c0_i32, %c0_i32_0 : i32, i32
  }
  func.func @transform_13(%arg0: i32, %arg1: i32) -> (i32, i32) {
    %c0_i32 = arith.constant 0 : i32
    %c0_i32_0 = arith.constant 0 : i32
    %c0_i32_1 = arith.constant 0 : i32
    return %c0_i32, %c0_i32_0 : i32, i32
  }
  func.func @transform_14(%arg0: i32, %arg1: i32) -> (i32, i32) {
    %c0_i32 = arith.constant 0 : i32
    %c0_i32_0 = arith.constant 0 : i32
    %c0_i32_1 = arith.constant 0 : i32
    return %c0_i32, %c0_i32_0 : i32, i32
  }
  func.func @transform_15(%arg0: i32, %arg1: i32) -> (i32, i32) {
    %c0_i32 = arith.constant 0 : i32
    %c0_i32_0 = arith.constant 0 : i32
    %c0_i32_1 = arith.constant 0 : i32
    return %c0_i32, %c0_i32_0 : i32, i32
  }
  func.func @transform_16(%arg0: i32, %arg1: i32) -> (i32, i32) {
    %c0_i32 = arith.constant 0 : i32
    %c0_i32_0 = arith.constant 0 : i32
    %c0_i32_1 = arith.constant 0 : i32
    return %c0_i32, %c0_i32_0 : i32, i32
  }
  func.func @transform_17(%arg0: i32, %arg1: i32) -> (i32, i32, i32) {
    %c0_i32 = arith.constant 0 : i32
    %c0_i32_0 = arith.constant 0 : i32
    return %arg0, %arg1, %c0_i32 : i32, i32, i32
  }
}

</mosaic_0001>

<llo_original>
// kernel: tpu_custom_call.1
$region0: #{tpu_custom_call.1}
  #allocation0 [shape = 'u32[]', space=smem, size = 0x4, offset = 0x4, fixed_abs, tag = 'smem constant byte address 0x4 - core index']
  #allocation1 [shape = 'u32[144,128]{1,0:T(1,128)}', space=vmem, size = 0x12000, scoped, tag = 'internal scratch']
  #allocation2 [shape = 'f32[8,32]{1,0:T(8,128)}', space=vmem, size = 0x1000, scoped, tag = 'scratch operand']
  %s0 = inlined_call_operand.vmem [shape: f32[2,8,32], index: 0, kind: input, shape index: {}]
  %s1 = inlined_call_operand.vmem [shape: f32[2,8,32], index: 1, kind: input, shape index: {}]
  %s2 = inlined_call_operand.hbm [shape: f32[1,8,8], index: 2, kind: input, shape index: {}]
  %s3 = inlined_call_operand.hbm [shape: f32[1,32], index: 3, kind: input, shape index: {}]
  %s4 = inlined_call_operand.hbm [shape: f32[1,32], index: 4, kind: input, shape index: {}]
  %s5 = inlined_call_operand.vmem [shape: bf16[32,32], index: 5, kind: input, shape index: {}]
  %s6 = inlined_call_operand.hbm [shape: f32[1,32], index: 6, kind: input, shape index: {}]
  %s7 = inlined_call_operand.vmem [shape: bf16[32,64], index: 7, kind: input, shape index: {}]
  %s8 = inlined_call_operand.hbm [shape: f32[1,64], index: 8, kind: input, shape index: {}]
  %s9 = inlined_call_operand.vmem [shape: bf16[32,32], index: 9, kind: input, shape index: {}]
  %s10 = inlined_call_operand.vmem [shape: f32[1,32], index: 10, kind: input, shape index: {}]
  %s11 = inlined_call_operand.vmem [shape: f32[1,32], index: 11, kind: input, shape index: {}]
  %s12 = inlined_call_operand.vmem [shape: f32[1,32], index: 12, kind: input, shape index: {}]
  %s13 = inlined_call_operand.vmem [shape: bf16[32,128], index: 13, kind: input, shape index: {}]
  %s14 = inlined_call_operand.vmem [shape: f32[1,128], index: 14, kind: input, shape index: {}]
  %s15 = inlined_call_operand.vmem [shape: bf16[128,32], index: 15, kind: input, shape index: {}]
  %s16 = inlined_call_operand.vmem [shape: f32[1,32], index: 16, kind: input, shape index: {}]
  %s17 = inlined_call_operand.hbm [shape: f32[2,8,32], index: 17, kind: output, shape index: {}]
  %s18 = sld [smem:[#allocation0]]
  $region121: #{tpu_custom_call.1} parent=0
    _
  %s20 = ssub.s32 1, %s18
  %s21 = scalar_select 0, %s20, %s18
  $region1: #{tpu_custom_call.1} parent=0
    #allocation3 [shape = 'u8[4096]{0}', space=vmem, size = 0x1000, scoped, tag = 'input window, operand 2, single buffered']
    #allocation4 [shape = 's32[2]{0}', space=sflag, size = 0x8, scoped, tag = 'scoped memory for tpu_custom_call.1']
    #allocation5 [shape = 's32[2]{0}', space=sflag, size = 0x8, scoped, tag = 'scoped memory for tpu_custom_call.1']
    #allocation6 [shape = 'u8[512]{0}', space=vmem, size = 0x400, scoped, tag = 'input window, operand 3, single buffered']
    #allocation7 [shape = 's32[1]{0}', space=sflag, size = 0x4, scoped, tag = 'scoped memory for tpu_custom_call.1']
    #allocation8 [shape = 'u8[512]{0}', space=vmem, size = 0x400, scoped, tag = 'input window, operand 4, single buffered']
    #allocation9 [shape = 'u8[512]{0}', space=vmem, size = 0x400, scoped, tag = 'input window, operand 6, single buffered']
    #allocation10 [shape = 's32[1]{0}', space=sflag, size = 0x4, scoped, tag = 'scoped memory for tpu_custom_call.1']
    #allocation11 [shape = 'u8[512]{0}', space=vmem, size = 0x400, scoped, tag = 'input window, operand 8, single buffered']
    #allocation12 [shape = 'u8[8192]{0}', space=vmem, size = 0x2000, scoped, tag = 'output window, operand 0']
    %22 = vsyncpa [#allocation4], 0
    %23 = vsyncpa [#allocation7], 0
    %24 = vsyncpa [#allocation10], 0
    %25 = vsyncpa [#allocation5], 0
    %s26 = scalar_lea.sflag [#allocation5], 1
    %27 = vsyncpa %s26, 0
    loop: start=0, step=1, limit=4
    $region2: #{tpu_custom_call.1} parent=1 // loop_pre_header
      _
    $region3: #{tpu_custom_call.1} parent=1 // loop_header
      %s29 = sphi 0, %s33
      %p30 = scmp.ge.s32.totalorder %s29, 4
      %s36 = sphi 0, %s48
      %s37 = sphi 0, %s44
      %s38 = sphi 0, %s36
      %s39 = sphi 0, %s37
      %s40 = sphi 0, %s38
      %s41 = sphi 0, %s39
      %s53 = sphi 0, %s55
      %s56 = sphi 0, %s53
      %s57 = sphi 0, %s56
      %s73 = sphi 0, %s57
      %s79 = sphi 0, %s81
      %s82 = sphi 0, %s79
      %s83 = sphi 0, %s82
      %s99 = sphi 0, %s83
      %s105 = sphi 0, %s107
      %s108 = sphi 0, %s105
      %s109 = sphi 0, %s108
      %s125 = sphi 0, %s109
      %s129 = sphi 0, %s129
      %s131 = sphi 0, %s129
      %s132 = sphi 0, %s131
      %s146 = sphi 0, %s132
      %s150 = sphi 0, %s150
      %s152 = sphi 0, %s150
      %s153 = sphi 0, %s152
      %s167 = sphi 0, %s153
      %s171 = sphi 0, %s171
      %s173 = sphi 0, %s171
      %s174 = sphi 0, %s173
      %s188 = sphi 0, %s174
      %s192 = sphi 0, %s192
      %s194 = sphi 0, %s192
      %s195 = sphi 0, %s194
      %s209 = sphi 0, %s195
      %s213 = sphi 0, %s213
      %s215 = sphi 0, %s213
      %s216 = sphi 0, %s215
      %s230 = sphi 0, %s216
      %s234 = sphi 0, %s234
      %s236 = sphi 0, %s234
      %s237 = sphi 0, %s236
      %s251 = sphi 0, %s237
      %s255 = sphi 0, %s255
      %s257 = sphi 0, %s255
      %s258 = sphi 0, %s257
      %s272 = sphi 0, %s258
      %s276 = sphi 0, %s276
      %s278 = sphi 0, %s276
      %s279 = sphi 0, %s278
      %s293 = sphi 0, %s279
      %s297 = sphi 0, %s297
      %s299 = sphi 0, %s297
      %s300 = sphi 0, %s299
      %s314 = sphi 0, %s300
      %s318 = sphi 0, %s318
      %s320 = sphi 0, %s318
      %s321 = sphi 0, %s320
      %s335 = sphi 0, %s321
      %s339 = sphi 0, %s339
      %s341 = sphi 0, %s339
      %s342 = sphi 0, %s341
      %s356 = sphi 0, %s342
      %s360 = sphi 0, %s360
      %s362 = sphi 0, %s360
      %s363 = sphi 0, %s362
      %s377 = sphi 0, %s363
      %s381 = sphi 0, %s381
      %s383 = sphi 0, %s381
      %s384 = sphi 0, %s383
      %s398 = sphi 0, %s384
      %s402 = sphi 0, %s402
      %s404 = sphi 0, %s402
      %s405 = sphi 0, %s404
      %s419 = sphi 0, %s405
      %s427 = sphi 0, %s429
      %s430 = sphi 0, %s427
      %s431 = sphi 0, %s430
      %s447 = sphi 0, %s431
    $region4: #{tpu_custom_call.1} parent=1 // loop_header_branch
      %32 = sbr.rel (%p30) target = $region8
    $region5: #{tpu_custom_call.1} parent=1 // loop_body
      %s34 = ssub.s32 %s29, 1
      %s35 = ssub.s32 %s29, 2
      %s42 = sadd.s32 1, %s37
      %p43 = scmp.ge.s32.totalorder %s42, 1
      %s44 = scalar_select %p43, 0, %s42
      %s45 = sadd.s32 1, %s36
      %s46 = scalar_select %p43, %s45, %s36
      %p47 = scmp.ge.s32.totalorder %s46, 2
      %s48 = scalar_select %p47, 0, %s46
      %s49 = ssub.s32 %s36, %s48
      %s50 = ssub.s32 %s37, %s44
      %s51 = sor.u32 %s49, %s50
      %p52 = scmp.eq.s32.totalorder %s51, 0
      %s54 = sadd.s32 %s53, 1
      %s55 = scalar_select %p52, %s53, %s54
      %p58 = pneg %p52
      %p59 = scmp.eq.s32.totalorder %s29, 1
      %p60 = por %p58, %p59
      %p61 = scmp.ne.s32.totalorder %s53, %s56
      %p62 = scmp.eq.s32.totalorder %s29, 0
      %p63 = por %p61, %p62
      %p64 = scmp.ne.s32.totalorder %s53, %s56
      %p65 = scmp.eq.s32.totalorder %s34, 1
      %p66 = por %p64, %p65
      %p67 = scmp.ne.s32.totalorder %s56, %s57
      %p68 = scmp.eq.s32.totalorder %s34, 0
      %p69 = por %p67, %p68
      %p70 = scmp.ne.s32.totalorder %s56, %s57
      %p71 = scmp.eq.s32.totalorder %s35, 1
      %p72 = por %p70, %p71
      %p74 = scmp.ne.s32.totalorder %s57, %s73
      %p75 = scmp.eq.s32.totalorder %s35, 0
      %p76 = por %p74, %p75
      %s77 = ssub.s32 %s36, %s48
      %p78 = scmp.eq.s32.totalorder %s77, 0
      %s80 = sadd.s32 %s79, 1
      %s81 = scalar_select %p78, %s79, %s80
      %p84 = pneg %p78
      %p85 = scmp.eq.s32.totalorder %s29, 1
      %p86 = por %p84, %p85
      %p87 = scmp.ne.s32.totalorder %s79, %s82
      %p88 = scmp.eq.s32.totalorder %s29, 0
      %p89 = por %p87, %p88
      %p90 = scmp.ne.s32.totalorder %s79, %s82
      %p91 = scmp.eq.s32.totalorder %s34, 1
      %p92 = por %p90, %p91
      %p93 = scmp.ne.s32.totalorder %s82, %s83
      %p94 = scmp.eq.s32.totalorder %s34, 0
      %p95 = por %p93, %p94
      %p96 = scmp.ne.s32.totalorder %s82, %s83
      %p97 = scmp.eq.s32.totalorder %s35, 1
      %p98 = por %p96, %p97
      %p100 = scmp.ne.s32.totalorder %s83, %s99
      %p101 = scmp.eq.s32.totalorder %s35, 0
      %p102 = por %p100, %p101
      %s103 = ssub.s32 %s37, %s44
      %p104 = scmp.eq.s32.totalorder %s103, 0
      %s106 = sadd.s32 %s105, 1
      %s107 = scalar_select %p104, %s105, %s106
      %p110 = pneg %p104
      %p111 = scmp.eq.s32.totalorder %s29, 1
      %p112 = por %p110, %p111
      %p113 = scmp.ne.s32.totalorder %s105, %s108
      %p114 = scmp.eq.s32.totalorder %s29, 0
      %p115 = por %p113, %p114
      %p116 = scmp.ne.s32.totalorder %s105, %s108
      %p117 = scmp.eq.s32.totalorder %s34, 1
      %p118 = por %p116, %p117
      %p119 = scmp.ne.s32.totalorder %s108, %s109
      %p120 = scmp.eq.s32.totalorder %s34, 0
      %p121 = por %p119, %p120
      %p122 = scmp.ne.s32.totalorder %s108, %s109
      %p123 = scmp.eq.s32.totalorder %s35, 1
      %p124 = por %p122, %p123
      %p126 = scmp.ne.s32.totalorder %s109, %s125
      %p127 = scmp.eq.s32.totalorder %s35, 0
      %p128 = por %p126, %p127
      %s130 = sadd.s32 %s129, 1
      %p133 = scmp.eq.s32.totalorder %s29, 1
      %p134 = scmp.ne.s32.totalorder %s129, %s131
      %p135 = scmp.eq.s32.totalorder %s29, 0
      %p136 = por %p134, %p135
      %p137 = scmp.ne.s32.totalorder %s129, %s131
      %p138 = scmp.eq.s32.totalorder %s34, 1
      %p139 = por %p137, %p138
      %p140 = scmp.ne.s32.totalorder %s131, %s132
      %p141 = scmp.eq.s32.totalorder %s34, 0
      %p142 = por %p140, %p141
      %p143 = scmp.ne.s32.totalorder %s131, %s132
      %p144 = scmp.eq.s32.totalorder %s35, 1
      %p145 = por %p143, %p144
      %p147 = scmp.ne.s32.totalorder %s132, %s146
      %p148 = scmp.eq.s32.totalorder %s35, 0
      %p149 = por %p147, %p148
      %s151 = sadd.s32 %s150, 1
      %p154 = scmp.eq.s32.totalorder %s29, 1
      %p155 = scmp.ne.s32.totalorder %s150, %s152
      %p156 = scmp.eq.s32.totalorder %s29, 0
      %p157 = por %p155, %p156
      %p158 = scmp.ne.s32.totalorder %s150, %s152
      %p159 = scmp.eq.s32.totalorder %s34, 1
      %p160 = por %p158, %p159
      %p161 = scmp.ne.s32.totalorder %s152, %s153
      %p162 = scmp.eq.s32.totalorder %s34, 0
      %p163 = por %p161, %p162
      %p164 = scmp.ne.s32.totalorder %s152, %s153
      %p165 = scmp.eq.s32.totalorder %s35, 1
      %p166 = por %p164, %p165
      %p168 = scmp.ne.s32.totalorder %s153, %s167
      %p169 = scmp.eq.s32.totalorder %s35, 0
      %p170 = por %p168, %p169
      %s172 = sadd.s32 %s171, 1
      %p175 = scmp.eq.s32.totalorder %s29, 1
      %p176 = scmp.ne.s32.totalorder %s171, %s173
      %p177 = scmp.eq.s32.totalorder %s29, 0
      %p178 = por %p176, %p177
      %p179 = scmp.ne.s32.totalorder %s171, %s173
      %p180 = scmp.eq.s32.totalorder %s34, 1
      %p181 = por %p179, %p180
      %p182 = scmp.ne.s32.totalorder %s173, %s174
      %p183 = scmp.eq.s32.totalorder %s34, 0
      %p184 = por %p182, %p183
      %p185 = scmp.ne.s32.totalorder %s173, %s174
      %p186 = scmp.eq.s32.totalorder %s35, 1
      %p187 = por %p185, %p186
      %p189 = scmp.ne.s32.totalorder %s174, %s188
      %p190 = scmp.eq.s32.totalorder %s35, 0
      %p191 = por %p189, %p190
      %s193 = sadd.s32 %s192, 1
      %p196 = scmp.eq.s32.totalorder %s29, 1
      %p197 = scmp.ne.s32.totalorder %s192, %s194
      %p198 = scmp.eq.s32.totalorder %s29, 0
      %p199 = por %p197, %p198
      %p200 = scmp.ne.s32.totalorder %s192, %s194
      %p201 = scmp.eq.s32.totalorder %s34, 1
      %p202 = por %p200, %p201
      %p203 = scmp.ne.s32.totalorder %s194, %s195
      %p204 = scmp.eq.s32.totalorder %s34, 0
      %p205 = por %p203, %p204
      %p206 = scmp.ne.s32.totalorder %s194, %s195
      %p207 = scmp.eq.s32.totalorder %s35, 1
      %p208 = por %p206, %p207
      %p210 = scmp.ne.s32.totalorder %s195, %s209
      %p211 = scmp.eq.s32.totalorder %s35, 0
      %p212 = por %p210, %p211
      %s214 = sadd.s32 %s213, 1
      %p217 = scmp.eq.s32.totalorder %s29, 1
      %p218 = scmp.ne.s32.totalorder %s213, %s215
      %p219 = scmp.eq.s32.totalorder %s29, 0
      %p220 = por %p218, %p219
      %p221 = scmp.ne.s32.totalorder %s213, %s215
      %p222 = scmp.eq.s32.totalorder %s34, 1
      %p223 = por %p221, %p222
      %p224 = scmp.ne.s32.totalorder %s215, %s216
      %p225 = scmp.eq.s32.totalorder %s34, 0
      %p226 = por %p224, %p225
      %p227 = scmp.ne.s32.totalorder %s215, %s216
      %p228 = scmp.eq.s32.totalorder %s35, 1
      %p229 = por %p227, %p228
      %p231 = scmp.ne.s32.totalorder %s216, %s230
      %p232 = scmp.eq.s32.totalorder %s35, 0
      %p233 = por %p231, %p232
      %s235 = sadd.s32 %s234, 1
      %p238 = scmp.eq.s32.totalorder %s29, 1
      %p239 = scmp.ne.s32.totalorder %s234, %s236
      %p240 = scmp.eq.s32.totalorder %s29, 0
      %p241 = por %p239, %p240
      %p242 = scmp.ne.s32.totalorder %s234, %s236
      %p243 = scmp.eq.s32.totalorder %s34, 1
      %p244 = por %p242, %p243
      %p245 = scmp.ne.s32.totalorder %s236, %s237
      %p246 = scmp.eq.s32.totalorder %s34, 0
      %p247 = por %p245, %p246
      %p248 = scmp.ne.s32.totalorder %s236, %s237
      %p249 = scmp.eq.s32.totalorder %s35, 1
      %p250 = por %p248, %p249
      %p252 = scmp.ne.s32.totalorder %s237, %s251
      %p253 = scmp.eq.s32.totalorder %s35, 0
      %p254 = por %p252, %p253
      %s256 = sadd.s32 %s255, 1
      %p259 = scmp.eq.s32.totalorder %s29, 1
      %p260 = scmp.ne.s32.totalorder %s255, %s257
      %p261 = scmp.eq.s32.totalorder %s29, 0
      %p262 = por %p260, %p261
      %p263 = scmp.ne.s32.totalorder %s255, %s257
      %p264 = scmp.eq.s32.totalorder %s34, 1
      %p265 = por %p263, %p264
      %p266 = scmp.ne.s32.totalorder %s257, %s258
      %p267 = scmp.eq.s32.totalorder %s34, 0
      %p268 = por %p266, %p267
      %p269 = scmp.ne.s32.totalorder %s257, %s258
      %p270 = scmp.eq.s32.totalorder %s35, 1
      %p271 = por %p269, %p270
      %p273 = scmp.ne.s32.totalorder %s258, %s272
      %p274 = scmp.eq.s32.totalorder %s35, 0
      %p275 = por %p273, %p274
      %s277 = sadd.s32 %s276, 1
      %p280 = scmp.eq.s32.totalorder %s29, 1
      %p281 = scmp.ne.s32.totalorder %s276, %s278
      %p282 = scmp.eq.s32.totalorder %s29, 0
      %p283 = por %p281, %p282
      %p284 = scmp.ne.s32.totalorder %s276, %s278
      %p285 = scmp.eq.s32.totalorder %s34, 1
      %p286 = por %p284, %p285
      %p287 = scmp.ne.s32.totalorder %s278, %s279
      %p288 = scmp.eq.s32.totalorder %s34, 0
      %p289 = por %p287, %p288
      %p290 = scmp.ne.s32.totalorder %s278, %s279
      %p291 = scmp.eq.s32.totalorder %s35, 1
      %p292 = por %p290, %p291
      %p294 = scmp.ne.s32.totalorder %s279, %s293
      %p295 = scmp.eq.s32.totalorder %s35, 0
      %p296 = por %p294, %p295
      %s298 = sadd.s32 %s297, 1
      %p301 = scmp.eq.s32.totalorder %s29, 1
      %p302 = scmp.ne.s32.totalorder %s297, %s299
      %p303 = scmp.eq.s32.totalorder %s29, 0
      %p304 = por %p302, %p303
      %p305 = scmp.ne.s32.totalorder %s297, %s299
      %p306 = scmp.eq.s32.totalorder %s34, 1
      %p307 = por %p305, %p306
      %p308 = scmp.ne.s32.totalorder %s299, %s300
      %p309 = scmp.eq.s32.totalorder %s34, 0
      %p310 = por %p308, %p309
      %p311 = scmp.ne.s32.totalorder %s299, %s300
      %p312 = scmp.eq.s32.totalorder %s35, 1
      %p313 = por %p311, %p312
      %p315 = scmp.ne.s32.totalorder %s300, %s314
      %p316 = scmp.eq.s32.totalorder %s35, 0
      %p317 = por %p315, %p316
      %s319 = sadd.s32 %s318, 1
      %p322 = scmp.eq.s32.totalorder %s29, 1
      %p323 = scmp.ne.s32.totalorder %s318, %s320
      %p324 = scmp.eq.s32.totalorder %s29, 0
      %p325 = por %p323, %p324
      %p326 = scmp.ne.s32.totalorder %s318, %s320
      %p327 = scmp.eq.s32.totalorder %s34, 1
      %p328 = por %p326, %p327
      %p329 = scmp.ne.s32.totalorder %s320, %s321
      %p330 = scmp.eq.s32.totalorder %s34, 0
      %p331 = por %p329, %p330
      %p332 = scmp.ne.s32.totalorder %s320, %s321
      %p333 = scmp.eq.s32.totalorder %s35, 1
      %p334 = por %p332, %p333
      %p336 = scmp.ne.s32.totalorder %s321, %s335
      %p337 = scmp.eq.s32.totalorder %s35, 0
      %p338 = por %p336, %p337
      %s340 = sadd.s32 %s339, 1
      %p343 = scmp.eq.s32.totalorder %s29, 1
      %p344 = scmp.ne.s32.totalorder %s339, %s341
      %p345 = scmp.eq.s32.totalorder %s29, 0
      %p346 = por %p344, %p345
      %p347 = scmp.ne.s32.totalorder %s339, %s341
      %p348 = scmp.eq.s32.totalorder %s34, 1
      %p349 = por %p347, %p348
      %p350 = scmp.ne.s32.totalorder %s341, %s342
      %p351 = scmp.eq.s32.totalorder %s34, 0
      %p352 = por %p350, %p351
      %p353 = scmp.ne.s32.totalorder %s341, %s342
      %p354 = scmp.eq.s32.totalorder %s35, 1
      %p355 = por %p353, %p354
      %p357 = scmp.ne.s32.totalorder %s342, %s356
      %p358 = scmp.eq.s32.totalorder %s35, 0
      %p359 = por %p357, %p358
      %s361 = sadd.s32 %s360, 1
      %p364 = scmp.eq.s32.totalorder %s29, 1
      %p365 = scmp.ne.s32.totalorder %s360, %s362
      %p366 = scmp.eq.s32.totalorder %s29, 0
      %p367 = por %p365, %p366
      %p368 = scmp.ne.s32.totalorder %s360, %s362
      %p369 = scmp.eq.s32.totalorder %s34, 1
      %p370 = por %p368, %p369
      %p371 = scmp.ne.s32.totalorder %s362, %s363
      %p372 = scmp.eq.s32.totalorder %s34, 0
      %p373 = por %p371, %p372
      %p374 = scmp.ne.s32.totalorder %s362, %s363
      %p375 = scmp.eq.s32.totalorder %s35, 1
      %p376 = por %p374, %p375
      %p378 = scmp.ne.s32.totalorder %s363, %s377
      %p379 = scmp.eq.s32.totalorder %s35, 0
      %p380 = por %p378, %p379
      %s382 = sadd.s32 %s381, 1
      %p385 = scmp.eq.s32.totalorder %s29, 1
      %p386 = scmp.ne.s32.totalorder %s381, %s383
      %p387 = scmp.eq.s32.totalorder %s29, 0
      %p388 = por %p386, %p387
      %p389 = scmp.ne.s32.totalorder %s381, %s383
      %p390 = scmp.eq.s32.totalorder %s34, 1
      %p391 = por %p389, %p390
      %p392 = scmp.ne.s32.totalorder %s383, %s384
      %p393 = scmp.eq.s32.totalorder %s34, 0
      %p394 = por %p392, %p393
      %p395 = scmp.ne.s32.totalorder %s383, %s384
      %p396 = scmp.eq.s32.totalorder %s35, 1
      %p397 = por %p395, %p396
      %p399 = scmp.ne.s32.totalorder %s384, %s398
      %p400 = scmp.eq.s32.totalorder %s35, 0
      %p401 = por %p399, %p400
      %s403 = sadd.s32 %s402, 1
      %p406 = scmp.eq.s32.totalorder %s29, 1
      %p407 = scmp.ne.s32.totalorder %s402, %s404
      %p408 = scmp.eq.s32.totalorder %s29, 0
      %p409 = por %p407, %p408
      %p410 = scmp.ne.s32.totalorder %s402, %s404
      %p411 = scmp.eq.s32.totalorder %s34, 1
      %p412 = por %p410, %p411
      %p413 = scmp.ne.s32.totalorder %s404, %s405
      %p414 = scmp.eq.s32.totalorder %s34, 0
      %p415 = por %p413, %p414
      %p416 = scmp.ne.s32.totalorder %s404, %s405
      %p417 = scmp.eq.s32.totalorder %s35, 1
      %p418 = por %p416, %p417
      %p420 = scmp.ne.s32.totalorder %s405, %s419
      %p421 = scmp.eq.s32.totalorder %s35, 0
      %p422 = por %p420, %p421
      %s423 = ssub.s32 %s36, %s48
      %s424 = ssub.s32 %s37, %s44
      %s425 = sor.u32 %s423, %s424
      %p426 = scmp.eq.s32.totalorder %s425, 0
      %s428 = sadd.s32 %s427, 1
      %s429 = scalar_select %p426, %s427, %s428
      %p432 = pneg %p426
      %p433 = scmp.eq.s32.totalorder %s29, 1
      %p434 = por %p432, %p433
      %p435 = scmp.ne.s32.totalorder %s427, %s430
      %p436 = scmp.eq.s32.totalorder %s29, 0
      %p437 = por %p435, %p436
      %p438 = scmp.ne.s32.totalorder %s427, %s430
      %p439 = scmp.eq.s32.totalorder %s34, 1
      %p440 = por %p438, %p439
      %p441 = scmp.ne.s32.totalorder %s430, %s431
      %p442 = scmp.eq.s32.totalorder %s34, 0
      %p443 = por %p441, %p442
      %p444 = scmp.ne.s32.totalorder %s430, %s431
      %p445 = scmp.eq.s32.totalorder %s35, 1
      %p446 = por %p444, %p445
      %p448 = scmp.ne.s32.totalorder %s431, %s447
      %p449 = scmp.eq.s32.totalorder %s35, 0
      %p450 = por %p448, %p449
      %p451 = scmp.le.s32.totalorder 1, %s29
      %p452 = scmp.lt.s32.totalorder %s29, 3
      %p453 = pnand %p451, %p452
      %p454 = pneg %p453
      // Predicated region
      $region9: #{tpu_custom_call.1} parent=5 // pred_check
        _
      $region10: #{tpu_custom_call.1} parent=5 // pred_check_branch
        %456 = sbr.rel (%p453) target = $region12
      $region11: #{tpu_custom_call.1} parent=5 // pred_region
        %s457 = ssub.s32 %s29, 1
        // Predicated region
        $region13: #{tpu_custom_call.1} parent=11 // pred_check
          %p458 = pneg %p121
        $region14: #{tpu_custom_call.1} parent=11 // pred_check_branch
          %460 = sbr.rel (%p458) target = $region16
        $region15: #{tpu_custom_call.1} parent=11 // pred_region
          %s462 = ssub.s32 128, 128
          %463 = vsyncadd [#allocation4], %s462
          %s464 = smul.addr %s39, 128
          %s465 = scalar_lea.hbm %s2, %s464
          %s467 = sshll.u32 [#allocation3], 4
          %s468 = int_to_ptr.vmem [resolvable:$true] %s467
          %470 = dma.hbm_to_vmem [thread:$0]  %s465, 128, %s468, [#allocation4]
        $region16: #{tpu_custom_call.1} parent=11 // pred_fallthru
          _
        // Predicated region
        $region17: #{tpu_custom_call.1} parent=11 // pred_check
          %p471 = pneg %p142
        $region18: #{tpu_custom_call.1} parent=11 // pred_check_branch
          %473 = sbr.rel (%p471) target = $region20
        $region19: #{tpu_custom_call.1} parent=11 // pred_region
          %s475 = ssub.s32 16, 16
          %476 = vsyncadd [#allocation7], %s475
          %s478 = sshll.u32 [#allocation6], 4
          %s479 = int_to_ptr.vmem [resolvable:$true] %s478
          %481 = dma.hbm_to_vmem [thread:$0]  %s3, 16, %s479, [#allocation7]
        $region20: #{tpu_custom_call.1} parent=11 // pred_fallthru
          _
        // Predicated region
        $region21: #{tpu_custom_call.1} parent=11 // pred_check
          %p482 = pneg %p163
        $region22: #{tpu_custom_call.1} parent=11 // pred_check_branch
          %484 = sbr.rel (%p482) target = $region24
        $region23: #{tpu_custom_call.1} parent=11 // pred_region
          %s486 = ssub.s32 16, 16
          %487 = vsyncadd [#allocation7], %s486
          %s489 = sshll.u32 [#allocation8], 4
          %s490 = int_to_ptr.vmem [resolvable:$true] %s489
          %492 = dma.hbm_to_vmem [thread:$0]  %s4, 16, %s490, [#allocation7]
        $region24: #{tpu_custom_call.1} parent=11 // pred_fallthru
          _
        // Predicated region
        $region25: #{tpu_custom_call.1} parent=11 // pred_check
          %p493 = pneg %p184
        $region26: #{tpu_custom_call.1} parent=11 // pred_check_branch
          %495 = sbr.rel (%p493) target = $region28
        $region27: #{tpu_custom_call.1} parent=11 // pred_region
          _
        $region28: #{tpu_custom_call.1} parent=11 // pred_fallthru
          _
        // Predicated region
        $region29: #{tpu_custom_call.1} parent=11 // pred_check
          %p496 = pneg %p205
        $region30: #{tpu_custom_call.1} parent=11 // pred_check_branch
          %498 = sbr.rel (%p496) target = $region32
        $region31: #{tpu_custom_call.1} parent=11 // pred_region
          %s500 = ssub.s32 16, 16
          %501 = vsyncadd [#allocation10], %s500
          %s503 = sshll.u32 [#allocation9], 4
          %s504 = int_to_ptr.vmem [resolvable:$true] %s503
          %506 = dma.hbm_to_vmem [thread:$0]  %s6, 16, %s504, [#allocation10]
        $region32: #{tpu_custom_call.1} parent=11 // pred_fallthru
          _
        // Predicated region
        $region33: #{tpu_custom_call.1} parent=11 // pred_check
          %p507 = pneg %p226
        $region34: #{tpu_custom_call.1} parent=11 // pred_check_branch
          %509 = sbr.rel (%p507) target = $region36
        $region35: #{tpu_custom_call.1} parent=11 // pred_region
          _
        $region36: #{tpu_custom_call.1} parent=11 // pred_fallthru
          _
        // Predicated region
        $region37: #{tpu_custom_call.1} parent=11 // pred_check
          %p510 = pneg %p247
        $region38: #{tpu_custom_call.1} parent=11 // pred_check_branch
          %512 = sbr.rel (%p510) target = $region40
        $region39: #{tpu_custom_call.1} parent=11 // pred_region
          %s514 = ssub.s32 16, 16
          %515 = vsyncadd [#allocation10], %s514
          %s517 = sshll.u32 [#allocation11], 4
          %s518 = int_to_ptr.vmem [resolvable:$true] %s517
          %520 = dma.hbm_to_vmem [thread:$0]  %s8, 16, %s518, [#allocation10]
        $region40: #{tpu_custom_call.1} parent=11 // pred_fallthru
          _
        // Predicated region
        $region41: #{tpu_custom_call.1} parent=11 // pred_check
          %p521 = pneg %p268
        $region42: #{tpu_custom_call.1} parent=11 // pred_check_branch
          %523 = sbr.rel (%p521) target = $region44
        $region43: #{tpu_custom_call.1} parent=11 // pred_region
          _
        $region44: #{tpu_custom_call.1} parent=11 // pred_fallthru
          _
        // Predicated region
        $region45: #{tpu_custom_call.1} parent=11 // pred_check
          %p524 = pneg %p289
        $region46: #{tpu_custom_call.1} parent=11 // pred_check_branch
          %526 = sbr.rel (%p524) target = $region48
        $region47: #{tpu_custom_call.1} parent=11 // pred_region
          _
        $region48: #{tpu_custom_call.1} parent=11 // pred_fallthru
          _
        // Predicated region
        $region49: #{tpu_custom_call.1} parent=11 // pred_check
          %p527 = pneg %p310
        $region50: #{tpu_custom_call.1} parent=11 // pred_check_branch
          %529 = sbr.rel (%p527) target = $region52
        $region51: #{tpu_custom_call.1} parent=11 // pred_region
          _
        $region52: #{tpu_custom_call.1} parent=11 // pred_fallthru
          _
        // Predicated region
        $region53: #{tpu_custom_call.1} parent=11 // pred_check
          %p530 = pneg %p331
        $region54: #{tpu_custom_call.1} parent=11 // pred_check_branch
          %532 = sbr.rel (%p530) target = $region56
        $region55: #{tpu_custom_call.1} parent=11 // pred_region
          _
        $region56: #{tpu_custom_call.1} parent=11 // pred_fallthru
          _
        // Predicated region
        $region57: #{tpu_custom_call.1} parent=11 // pred_check
          %p533 = pneg %p352
        $region58: #{tpu_custom_call.1} parent=11 // pred_check_branch
          %535 = sbr.rel (%p533) target = $region60
        $region59: #{tpu_custom_call.1} parent=11 // pred_region
          _
        $region60: #{tpu_custom_call.1} parent=11 // pred_fallthru
          _
        // Predicated region
        $region61: #{tpu_custom_call.1} parent=11 // pred_check
          %p536 = pneg %p373
        $region62: #{tpu_custom_call.1} parent=11 // pred_check_branch
          %538 = sbr.rel (%p536) target = $region64
        $region63: #{tpu_custom_call.1} parent=11 // pred_region
          _
        $region64: #{tpu_custom_call.1} parent=11 // pred_fallthru
          _
        // Predicated region
        $region65: #{tpu_custom_call.1} parent=11 // pred_check
          %p539 = pneg %p394
        $region66: #{tpu_custom_call.1} parent=11 // pred_check_branch
          %541 = sbr.rel (%p539) target = $region68
        $region67: #{tpu_custom_call.1} parent=11 // pred_region
          _
        $region68: #{tpu_custom_call.1} parent=11 // pred_fallthru
          _
        // Predicated region
        $region69: #{tpu_custom_call.1} parent=11 // pred_check
          %p542 = pneg %p415
        $region70: #{tpu_custom_call.1} parent=11 // pred_check_branch
          %544 = sbr.rel (%p542) target = $region72
        $region71: #{tpu_custom_call.1} parent=11 // pred_region
          _
        $region72: #{tpu_custom_call.1} parent=11 // pred_fallthru
          _
      $region12: #{tpu_custom_call.1} parent=5 // pred_fallthru
        _
      %p545 = scmp.lt.s32.totalorder %s29, 2
      // Predicated region
      $region73: #{tpu_custom_call.1} parent=5 // pred_check
        %p546 = pneg %p545
      $region74: #{tpu_custom_call.1} parent=5 // pred_check_branch
        %548 = sbr.rel (%p546) target = $region76
      $region75: #{tpu_custom_call.1} parent=5 // pred_region
        // Predicated region
        $region77: #{tpu_custom_call.1} parent=75 // pred_check
          %p549 = pneg %p63
        $region78: #{tpu_custom_call.1} parent=75 // pred_check_branch
          %551 = sbr.rel (%p549) target = $region80
        $region79: #{tpu_custom_call.1} parent=75 // pred_region
          %p552 = scmp.lt.s32.totalorder %s36, 1
          %s553 = scalar_select %p552, %s36, 1
          %p554 = scmp.lt.s32.totalorder %s37, 0
          %s555 = scalar_select %p554, %s37, 0
          %s556 = sadd.s32 %s555, %s553
          %s557 = smul.addr %s556, 8
          %s558 = scalar_lea.vmem %s0, %s557
        $region80: #{tpu_custom_call.1} parent=75 // pred_fallthru
          _
        // Predicated region
        $region81: #{tpu_custom_call.1} parent=75 // pred_check
          %p559 = pneg %p89
        $region82: #{tpu_custom_call.1} parent=75 // pred_check_branch
          %561 = sbr.rel (%p559) target = $region84
        $region83: #{tpu_custom_call.1} parent=75 // pred_region
          %p562 = scmp.lt.s32.totalorder %s36, 1
          %s563 = scalar_select %p562, %s36, 1
          %s564 = smul.addr %s563, 8
          %s565 = scalar_lea.vmem %s1, %s564
        $region84: #{tpu_custom_call.1} parent=75 // pred_fallthru
          _
      $region76: #{tpu_custom_call.1} parent=5 // pred_fallthru
        _
      %p566 = scmp.le.s32.totalorder 1, %s29
      %p567 = scmp.lt.s32.totalorder %s29, 3
      %p568 = pnand %p566, %p567
      %p569 = pneg %p568
      // Predicated region
      $region85: #{tpu_custom_call.1} parent=5 // pred_check
        _
      $region86: #{tpu_custom_call.1} parent=5 // pred_check_branch
        %571 = sbr.rel (%p568) target = $region88
      $region87: #{tpu_custom_call.1} parent=5 // pred_region
        %s572 = ssub.s32 %s29, 1
        // Predicated region
        $region89: #{tpu_custom_call.1} parent=87 // pred_check
          %p573 = pneg %p121
        $region90: #{tpu_custom_call.1} parent=87 // pred_check_branch
          %575 = sbr.rel (%p573) target = $region92
        $region91: #{tpu_custom_call.1} parent=87 // pred_region
          %576 = dma.done [#allocation4], 128
        $region92: #{tpu_custom_call.1} parent=87 // pred_fallthru
          _
        // Predicated region
        $region93: #{tpu_custom_call.1} parent=87 // pred_check
          %p577 = pneg %p142
        $region94: #{tpu_custom_call.1} parent=87 // pred_check_branch
          %579 = sbr.rel (%p577) target = $region96
        $region95: #{tpu_custom_call.1} parent=87 // pred_region
          %580 = dma.done [#allocation7], 16
        $region96: #{tpu_custom_call.1} parent=87 // pred_fallthru
          _
        // Predicated region
        $region97: #{tpu_custom_call.1} parent=87 // pred_check
          %p581 = pneg %p163
        $region98: #{tpu_custom_call.1} parent=87 // pred_check_branch
          %583 = sbr.rel (%p581) target = $region100
        $region99: #{tpu_custom_call.1} parent=87 // pred_region
          %584 = dma.done [#allocation7], 16
        $region100: #{tpu_custom_call.1} parent=87 // pred_fallthru
          _
        // Predicated region
        $region101: #{tpu_custom_call.1} parent=87 // pred_check
          %p585 = pneg %p205
        $region102: #{tpu_custom_call.1} parent=87 // pred_check_branch
          %587 = sbr.rel (%p585) target = $region104
        $region103: #{tpu_custom_call.1} parent=87 // pred_region
          %588 = dma.done [#allocation10], 16
        $region104: #{tpu_custom_call.1} parent=87 // pred_fallthru
          _
        // Predicated region
        $region105: #{tpu_custom_call.1} parent=87 // pred_check
          %p589 = pneg %p247
        $region106: #{tpu_custom_call.1} parent=87 // pred_check_branch
          %591 = sbr.rel (%p589) target = $region108
        $region107: #{tpu_custom_call.1} parent=87 // pred_region
          %592 = dma.done [#allocation10], 16
        $region108: #{tpu_custom_call.1} parent=87 // pred_fallthru
          _
        %p593 = scmp.lt.s32.totalorder %s38, 1
        %s594 = scalar_select %p593, %s38, 1
        %p595 = scmp.lt.s32.totalorder %s39, 0
        %s596 = scalar_select %p595, %s39, 0
        %s597 = sadd.s32 %s596, %s594
        %s598 = smul.addr %s597, 8
        %s599 = scalar_lea.vmem %s0, %s598
        %p600 = pneg %p69
        %p601 = pneg %p66
        %p602 = scmp.lt.s32.totalorder %s38, 1
        %s603 = scalar_select %p602, %s38, 1
        %s604 = smul.addr %s603, 8
        %s605 = scalar_lea.vmem %s1, %s604
        %p606 = pneg %p95
        %p607 = pneg %p92
        %p608 = pneg %p121
        %p609 = pneg %p118
        %p610 = pneg %p142
        %p611 = pneg %p139
        %p612 = pneg %p163
        %p613 = pneg %p160
        %p614 = pneg %p184
        %p615 = pneg %p181
        %p616 = pneg %p205
        %p617 = pneg %p202
        %p618 = pneg %p226
        %p619 = pneg %p223
        %p620 = pneg %p247
        %p621 = pneg %p244
        %p622 = pneg %p268
        %p623 = pneg %p265
        %p624 = pneg %p289
        %p625 = pneg %p286
        %p626 = pneg %p310
        %p627 = pneg %p307
        %p628 = pneg %p331
        %p629 = pneg %p328
        %p630 = pneg %p352
        %p631 = pneg %p349
        %p632 = pneg %p373
        %p633 = pneg %p370
        %p634 = pneg %p394
        %p635 = pneg %p391
        %p636 = pneg %p415
        %p637 = pneg %p412
        %p638 = pneg %p443
        %p639 = pneg %p440
        %s640 = sand.u32 %s430, 1
        %s641 = scalar_lea.sflag [#allocation5], %s640
        %s642 = sand.u32 %s430, 1
        %s643 = smul.addr %s642, 8
        %s644 = scalar_lea.vmem [#allocation12], %s643
        %p645 = scmp.lt.s32.totalorder %s38, 1
        %s646 = scalar_select %p645, %s38, 1
        %p647 = scmp.lt.s32.totalorder %s39, 0
        %s648 = scalar_select %p647, %s39, 0
        %s649 = sadd.s32 %s648, %s646
        %s650 = smul.addr %s649, 8
        %s651 = scalar_lea.vmem %s0, %s650
        %p652 = scmp.lt.s32.totalorder %s38, 1
        %s653 = scalar_select %p652, %s38, 1
        %s654 = smul.addr %s653, 8
        %s655 = scalar_lea.vmem %s1, %s654
        %v657 = vld [vmem:[%s651] sm:$0xff]
        %v658 = vld [vmem:[%s655] sm:$0xff]
        %v659 = vld [vmem:[#allocation3] sm:$0xff]
        %v660 = vld [vmem:[#allocation6] sm:$0x1]
        %v661 = vld [vmem:[#allocation8] sm:$0x1]
        %vm662 = vcmask 261120
        %v663 = vsel %vm662, %v657, 0.0
        %664 = vadd.xlane.f32.xlu0 %v663
        %v665 = vpop.xlane.xlu0 %664
        %v666 = vrcp.pop 32.0
        %v667 = vmul.f32 %v665, %v666
        %v668 = vsub.f32 %v657, %v667
        %v669 = vmul.f32 %v668, %v668
        %v670 = vsel %vm662, %v669, 0.0
        %671 = vadd.xlane.f32.xlu0 %v670
        %v672 = vpop.xlane.xlu0 %671
        %v673 = vmul.f32 %v672, %v666
        %v674 = vadd.f32 %v673, 1e-05
        %v675 = vrsqrt.pop %v674
        %v676 = vmul.f32 %v668, %v675
        %v678 = vlaneseq
        %v679 = vshrl.u32 %v678, 7
        %v680 = vsub.s32 0, %v679
        %v681 = vrot.slane %v660, %v680
        %v683 = vmul.f32 %v676, %v681
        %v685 = vlaneseq
        %v686 = vshrl.u32 %v685, 7
        %v687 = vsub.s32 0, %v686
        %v688 = vrot.slane %v661, %v687
        %v690 = vadd.f32 %v683, %v688
        %v691 = vsel %vm662, %v658, 0.0
        %692 = vadd.xlane.f32.xlu0 %v691
        %v693 = vpop.xlane.xlu0 %692
        %v694 = vmul.f32 %v693, %v666
        %v695 = vsub.f32 %v658, %v694
        %v696 = vmul.f32 %v695, %v695
        %v697 = vsel %vm662, %v696, 0.0
        %698 = vadd.xlane.f32.xlu0 %v697
        %v699 = vpop.xlane.xlu0 %698
        %v700 = vmul.f32 %v699, %v666
        %v701 = vadd.f32 %v700, 1e-05
        %v702 = vrsqrt.pop %v701
        %v703 = vmul.f32 %v695, %v702
        %v704 = vmul.f32 %v703, %v681
        %v705 = vadd.f32 %v704, %v688
        %v706 = vpack.c.bf16 %v690, %v690
        %v707 = vld [vmem:[%s5] sm:$0xf]
        %v708 = vld [vmem:[%s5 + $0x4] sm:$0xf]
        %v709 = vld [vmem:[%s5 + $0x8] sm:$0xf]
        %v710 = vld [vmem:[%s5 + $0xc] sm:$0xf]
        %v711 = vld [vmem:[#allocation9] sm:$0x1]
        %v713 = vlaneseq
        %v714 = vshrl.u32 %v713, 7
        %v715 = vsub.s32 0, %v714
        %v716 = vrot.slane %v711, %v715
        %v722 = vunpack.c.l.b16 %v707
        %v723 = vunpack.c.l.b16 %v708
        %v724 = vunpack.c.l.b16 %v709
        %v725 = vunpack.c.l.b16 %v710
        %v726 = vpack.c.b16 %v723, %v722
        %v727 = vpack.c.b16 %v725, %v724
        %v731 = vsel %vm662, %v706, 0
        %733 = vmatprep.subr.bf16.mxu0 0
        %734 = vmatpush1.bf16.msra.mxu0 0
        %735 = vmatprep.subr.bf16.mxu0 0
        %736 = vmatpush1.bf16.msra.mxu0 0
        %737 = vmatprep.subr.bf16.mxu0 0
        %738 = vmatpush1.bf16.msra.mxu0 0
        %739 = vmatprep.subr.bf16.mxu0 0
        %740 = vmatpush1.bf16.msra.mxu0 0
        %741 = vmatprep.subr.bf16.mxu0 0
        %742 = vmatpush1.bf16.msra.mxu0 0
        %743 = vmatprep.subr.bf16.mxu0 0
        %744 = vmatpush1.bf16.msra.mxu0 0
        %745 = vmatprep.subr.bf16.mxu0 0
        %746 = vmatpush1.bf16.msra.mxu0 %v727
        %747 = vmatprep.subr.bf16.mxu0 0
        %748 = vmatpush1.bf16.msra.mxu0 %v726
        %749 = vmatprep.subr.bf16.mxu0 0
        %750 = vmatpush2.bf16.msra.mxu0 0
        %751 = vmatprep.subr.bf16.mxu0 0
        %752 = vmatpush2.bf16.msra.mxu0 0
        %753 = vmatprep.subr.bf16.mxu0 0
        %754 = vmatpush2.bf16.msra.mxu0 0
        %755 = vmatprep.subr.bf16.mxu0 0
        %756 = vmatpush2.bf16.msra.mxu0 0
        %757 = vmatprep.subr.bf16.mxu0 0
        %758 = vmatpush2.bf16.msra.mxu0 0
        %759 = vmatprep.subr.bf16.mxu0 0
        %760 = vmatpush2.bf16.msra.mxu0 0
        %761 = vmatprep.subr.bf16.mxu0 0
        %762 = vmatpush2.bf16.msra.mxu0 0
        %763 = vmatprep.subr.bf16.mxu0 0
        %764 = vmatpush2.bf16.msra.mxu0 0
        %765 = vmatprep.mubr.bf16.mxu0 0
        %766 = vmatmul.mubr.bf16.gmra.mxu0 %v731
        %v767 = vpop.f32.mrf.mxu0
        %v768 = vadd.f32 %v716, %v767
        %v769 = vpop.f32.mrf.mxu0
        %v770 = vpop.f32.mrf.mxu0
        %v771 = vpop.f32.mrf.mxu0
        %772 = vdwg.mxu0
        %v773 = vmul.f32 %v768, 0.35355338
        %v774 = vpack.c.bf16 %v705, %v705
        %v775 = vld [vmem:[%s7] sm:$0xf]
        %v776 = vld [vmem:[%s7 + $0x4] sm:$0xf]
        %v777 = vld [vmem:[%s7 + $0x8] sm:$0xf]
        %v778 = vld [vmem:[%s7 + $0xc] sm:$0xf]
        %v779 = vld [vmem:[#allocation11] sm:$0x1]
        %v781 = vlaneseq
        %v782 = vshrl.u32 %v781, 7
        %v783 = vsub.s32 0, %v782
        %v784 = vrot.slane %v779, %v783
        %v790 = vunpack.c.l.b16 %v775
        %v791 = vunpack.c.l.b16 %v776
        %v792 = vunpack.c.l.b16 %v777
        %v793 = vunpack.c.l.b16 %v778
        %v794 = vpack.c.b16 %v791, %v790
        %v795 = vpack.c.b16 %v793, %v792
        %v799 = vsel %vm662, %v774, 0
        %801 = vmatprep.subr.bf16.mxu0 0
        %802 = vmatpush1.bf16.msra.mxu0 0
        %803 = vmatprep.subr.bf16.mxu0 0
        %804 = vmatpush1.bf16.msra.mxu0 0
        %805 = vmatprep.subr.bf16.mxu0 0
        %806 = vmatpush1.bf16.msra.mxu0 0
        %807 = vmatprep.subr.bf16.mxu0 0
        %808 = vmatpush1.bf16.msra.mxu0 0
        %809 = vmatprep.subr.bf16.mxu0 0
        %810 = vmatpush1.bf16.msra.mxu0 0
        %811 = vmatprep.subr.bf16.mxu0 0
        %812 = vmatpush1.bf16.msra.mxu0 0
        %813 = vmatprep.subr.bf16.mxu0 0
        %814 = vmatpush1.bf16.msra.mxu0 %v795
        %815 = vmatprep.subr.bf16.mxu0 0
        %816 = vmatpush1.bf16.msra.mxu0 %v794
        %817 = vmatprep.subr.bf16.mxu0 0
        %818 = vmatpush2.bf16.msra.mxu0 0
        %819 = vmatprep.subr.bf16.mxu0 0
        %820 = vmatpush2.bf16.msra.mxu0 0
        %821 = vmatprep.subr.bf16.mxu0 0
        %822 = vmatpush2.bf16.msra.mxu0 0
        %823 = vmatprep.subr.bf16.mxu0 0
        %824 = vmatpush2.bf16.msra.mxu0 0
        %825 = vmatprep.subr.bf16.mxu0 0
        %826 = vmatpush2.bf16.msra.mxu0 0
        %827 = vmatprep.subr.bf16.mxu0 0
        %828 = vmatpush2.bf16.msra.mxu0 0
        %829 = vmatprep.subr.bf16.mxu0 0
        %830 = vmatpush2.bf16.msra.mxu0 0
        %831 = vmatprep.subr.bf16.mxu0 0
        %832 = vmatpush2.bf16.msra.mxu0 0
        %833 = vmatprep.mubr.bf16.mxu0 0
        %834 = vmatmul.mubr.bf16.gmra.mxu0 %v799
        %v835 = vpop.f32.mrf.mxu0
        %v836 = vadd.f32 %v784, %v835
        %v837 = vpop.f32.mrf.mxu0
        %v838 = vpop.f32.mrf.mxu0
        %v839 = vpop.f32.mrf.mxu0
        %840 = vdwg.mxu0
        %v841 = vpack.c.bf16 %v773, %v773
        %v842 = vpack.c.bf16 %v836, %v836
        %vm843 = vcmp.eq.f32.partialorder %v659, 0.0
        %v844 = vsel %vm843, -1e+09, 0.0
        %vm845 = vcmask 64512
        %v847 = vsel %vm845, %v841, 0
        %v850 = vsel %vm845, %v842, 0
        %852 = vmatprep.subr.bf16.mxu0 0
        %853 = vmatpush1.bf16.xpose.msra.mxu0 0
        %854 = vmatprep.subr.bf16.mxu0 0
        %855 = vmatpush1.bf16.xpose.msra.mxu0 0
        %856 = vmatprep.subr.bf16.mxu0 0
        %857 = vmatpush1.bf16.xpose.msra.mxu0 0
        %858 = vmatprep.subr.bf16.mxu0 0
        %859 = vmatpush1.bf16.xpose.msra.mxu0 0
        %860 = vmatprep.subr.bf16.mxu0 0
        %861 = vmatpush1.bf16.xpose.msra.mxu0 0
        %862 = vmatprep.subr.bf16.mxu0 0
        %863 = vmatpush1.bf16.xpose.msra.mxu0 0
        %864 = vmatprep.subr.bf16.mxu0 0
        %865 = vmatpush1.bf16.xpose.msra.mxu0 0
        %866 = vmatprep.subr.bf16.mxu0 0
        %867 = vmatpush1.bf16.xpose.msra.mxu0 %v850
        %868 = vmatprep.subr.bf16.mxu0 0
        %869 = vmatpush2.bf16.xpose.msra.mxu0 0
        %870 = vmatprep.subr.bf16.mxu0 0
        %871 = vmatpush2.bf16.xpose.msra.mxu0 0
        %872 = vmatprep.subr.bf16.mxu0 0
        %873 = vmatpush2.bf16.xpose.msra.mxu0 0
        %874 = vmatprep.subr.bf16.mxu0 0
        %875 = vmatpush2.bf16.xpose.msra.mxu0 0
        %876 = vmatprep.subr.bf16.mxu0 0
        %877 = vmatpush2.bf16.xpose.msra.mxu0 0
        %878 = vmatprep.subr.bf16.mxu0 0
        %879 = vmatpush2.bf16.xpose.msra.mxu0 0
        %880 = vmatprep.subr.bf16.mxu0 0
        %881 = vmatpush2.bf16.xpose.msra.mxu0 0
        %882 = vmatprep.subr.bf16.mxu0 0
        %883 = vmatpush2.bf16.xpose.msra.mxu0 0
        %884 = vmatprep.mubr.bf16.mxu0 0
        %885 = vmatmul.mubr.bf16.gmra.mxu0 %v847
        %v886 = vpop.f32.mrf.mxu0
        %v887 = vadd.f32 %v844, %v886
        %v888 = vpop.f32.mrf.mxu0
        %v889 = vpop.f32.mrf.mxu0
        %v890 = vpop.f32.mrf.mxu0
        %891 = vdwg.mxu0
        %v892 = vsel %vm845, %v887, -inf
        %893 = vmax.xlane.f32.xlu0 %v892
        %v894 = vpop.xlane.xlu0 %893
        %v895 = vsub.f32 %v887, %v894
        %v896 = vmul.f32 %v895, 1.442695
        %v897 = vpow.pop %v896
        %v898 = vsel %vm845, %v897, 0.0
        %899 = vadd.xlane.f32.xlu0 %v898
        %v900 = vpop.xlane.xlu0 %899
        %v901 = vrcp.pop %v900
        %v902 = vmul.f32 %v897, %v901
        %v903 = vpack.c.bf16 %v902, %v902
        %905 = vrot.lane.b32.xlu0 %v842, 96
        %v906 = vpop.permute.xlu0 %905
        %v908 = vsel %vm845, %v903, 0
        %vm910 = vcmask 1043456
        %v912 = vsel %vm910, %v906, 0
        %914 = vmatprep.subr.bf16.mxu0 0
        %915 = vmatpush1.bf16.msra.mxu0 0
        %916 = vmatprep.subr.bf16.mxu0 0
        %917 = vmatpush1.bf16.msra.mxu0 0
        %918 = vmatprep.subr.bf16.mxu0 0
        %919 = vmatpush1.bf16.msra.mxu0 0
        %920 = vmatprep.subr.bf16.mxu0 0
        %921 = vmatpush1.bf16.msra.mxu0 0
        %922 = vmatprep.subr.bf16.mxu0 0
        %923 = vmatpush1.bf16.msra.mxu0 0
        %924 = vmatprep.subr.bf16.mxu0 0
        %925 = vmatpush1.bf16.msra.mxu0 0
        %926 = vmatprep.subr.bf16.mxu0 0
        %927 = vmatpush1.bf16.msra.mxu0 0
        %928 = vmatprep.subr.bf16.mxu0 0
        %929 = vmatpush1.bf16.msra.mxu0 %v912
        %930 = vmatprep.subr.bf16.mxu0 0
        %931 = vmatpush2.bf16.msra.mxu0 0
        %932 = vmatprep.subr.bf16.mxu0 0
        %933 = vmatpush2.bf16.msra.mxu0 0
        %934 = vmatprep.subr.bf16.mxu0 0
        %935 = vmatpush2.bf16.msra.mxu0 0
        %936 = vmatprep.subr.bf16.mxu0 0
        %937 = vmatpush2.bf16.msra.mxu0 0
        %938 = vmatprep.subr.bf16.mxu0 0
        %939 = vmatpush2.bf16.msra.mxu0 0
        %940 = vmatprep.subr.bf16.mxu0 0
        %941 = vmatpush2.bf16.msra.mxu0 0
        %942 = vmatprep.subr.bf16.mxu0 0
        %943 = vmatpush2.bf16.msra.mxu0 0
        %944 = vmatprep.subr.bf16.mxu0 0
        %945 = vmatpush2.bf16.msra.mxu0 0
        %946 = vmatprep.mubr.bf16.mxu0 0
        %947 = vmatmul.mubr.bf16.gmra.mxu0 %v908
        %v948 = vpop.f32.mrf.mxu0
        %v949 = vadd.f32 0.0, %v948
        %v950 = vpop.f32.mrf.mxu0
        %v951 = vpop.f32.mrf.mxu0
        %v952 = vpop.f32.mrf.mxu0
        %953 = vdwg.mxu0
        %954 = vst.msk [vmem:[#allocation2] sm:$0xff] %vm845, %v949
        %956 = vrot.lane.b32.xlu0 %v841, 120
        %v957 = vpop.permute.xlu0 %956
        %958 = vrot.lane.b32.xlu0 %v842, 120
        %v959 = vpop.permute.xlu0 %958
        %v961 = vsel %vm845, %v957, 0
        %v964 = vsel %vm845, %v959, 0
        %966 = vmatprep.subr.bf16.mxu0 0
        %967 = vmatpush1.bf16.xpose.msra.mxu0 0
        %968 = vmatprep.subr.bf16.mxu0 0
        %969 = vmatpush1.bf16.xpose.msra.mxu0 0
        %970 = vmatprep.subr.bf16.mxu0 0
        %971 = vmatpush1.bf16.xpose.msra.mxu0 0
        %972 = vmatprep.subr.bf16.mxu0 0
        %973 = vmatpush1.bf16.xpose.msra.mxu0 0
        %974 = vmatprep.subr.bf16.mxu0 0
        %975 = vmatpush1.bf16.xpose.msra.mxu0 0
        %976 = vmatprep.subr.bf16.mxu0 0
        %977 = vmatpush1.bf16.xpose.msra.mxu0 0
        %978 = vmatprep.subr.bf16.mxu0 0
        %979 = vmatpush1.bf16.xpose.msra.mxu0 0
        %980 = vmatprep.subr.bf16.mxu0 0
        %981 = vmatpush1.bf16.xpose.msra.mxu0 %v964
        %982 = vmatprep.subr.bf16.mxu0 0
        %983 = vmatpush2.bf16.xpose.msra.mxu0 0
        %984 = vmatprep.subr.bf16.mxu0 0
        %985 = vmatpush2.bf16.xpose.msra.mxu0 0
        %986 = vmatprep.subr.bf16.mxu0 0
        %987 = vmatpush2.bf16.xpose.msra.mxu0 0
        %988 = vmatprep.subr.bf16.mxu0 0
        %989 = vmatpush2.bf16.xpose.msra.mxu0 0
        %990 = vmatprep.subr.bf16.mxu0 0
        %991 = vmatpush2.bf16.xpose.msra.mxu0 0
        %992 = vmatprep.subr.bf16.mxu0 0
        %993 = vmatpush2.bf16.xpose.msra.mxu0 0
        %994 = vmatprep.subr.bf16.mxu0 0
        %995 = vmatpush2.bf16.xpose.msra.mxu0 0
        %996 = vmatprep.subr.bf16.mxu0 0
        %997 = vmatpush2.bf16.xpose.msra.mxu0 0
        %998 = vmatprep.mubr.bf16.mxu0 0
        %999 = vmatmul.mubr.bf16.gmra.mxu0 %v961
        %v1000 = vpop.f32.mrf.mxu0
        %v1001 = vadd.f32 %v844, %v1000
        %v1002 = vpop.f32.mrf.mxu0
        %v1003 = vpop.f32.mrf.mxu0
        %v1004 = vpop.f32.mrf.mxu0
        %1005 = vdwg.mxu0
        %v1006 = vsel %vm845, %v1001, -inf
        %1007 = vmax.xlane.f32.xlu0 %v1006
        %v1008 = vpop.xlane.xlu0 %1007
        %v1009 = vsub.f32 %v1001, %v1008
        %v1010 = vmul.f32 %v1009, 1.442695
        %v1011 = vpow.pop %v1010
        %v1012 = vsel %vm845, %v1011, 0.0
        %1013 = vadd.xlane.f32.xlu0 %v1012
        %v1014 = vpop.xlane.xlu0 %1013
        %v1015 = vrcp.pop %v1014
        %v1016 = vmul.f32 %v1011, %v1015
        %v1017 = vpack.c.bf16 %v1016, %v1016
        %1018 = vrot.lane.b32.xlu0 %v842, 88
        %v1019 = vpop.permute.xlu0 %1018
        %v1021 = vsel %vm845, %v1017, 0
        %v1024 = vsel %vm910, %v1019, 0
        %1026 = vmatprep.subr.bf16.mxu0 0
        %1027 = vmatpush1.bf16.msra.mxu0 0
        %1028 = vmatprep.subr.bf16.mxu0 0
        %1029 = vmatpush1.bf16.msra.mxu0 0
        %1030 = vmatprep.subr.bf16.mxu0 0
        %1031 = vmatpush1.bf16.msra.mxu0 0
        %1032 = vmatprep.subr.bf16.mxu0 0
        %1033 = vmatpush1.bf16.msra.mxu0 0
        %1034 = vmatprep.subr.bf16.mxu0 0
        %1035 = vmatpush1.bf16.msra.mxu0 0
        %1036 = vmatprep.subr.bf16.mxu0 0
        %1037 = vmatpush1.bf16.msra.mxu0 0
        %1038 = vmatprep.subr.bf16.mxu0 0
        %1039 = vmatpush1.bf16.msra.mxu0 0
        %1040 = vmatprep.subr.bf16.mxu0 0
        %1041 = vmatpush1.bf16.msra.mxu0 %v1024
        %1042 = vmatprep.subr.bf16.mxu0 0
        %1043 = vmatpush2.bf16.msra.mxu0 0
        %1044 = vmatprep.subr.bf16.mxu0 0
        %1045 = vmatpush2.bf16.msra.mxu0 0
        %1046 = vmatprep.subr.bf16.mxu0 0
        %1047 = vmatpush2.bf16.msra.mxu0 0
        %1048 = vmatprep.subr.bf16.mxu0 0
        %1049 = vmatpush2.bf16.msra.mxu0 0
        %1050 = vmatprep.subr.bf16.mxu0 0
        %1051 = vmatpush2.bf16.msra.mxu0 0
        %1052 = vmatprep.subr.bf16.mxu0 0
        %1053 = vmatpush2.bf16.msra.mxu0 0
        %1054 = vmatprep.subr.bf16.mxu0 0
        %1055 = vmatpush2.bf16.msra.mxu0 0
        %1056 = vmatprep.subr.bf16.mxu0 0
        %1057 = vmatpush2.bf16.msra.mxu0 0
        %1058 = vmatprep.mubr.bf16.mxu0 0
        %1059 = vmatmul.mubr.bf16.gmra.mxu0 %v1021
        %v1060 = vpop.f32.mrf.mxu0
        %v1061 = vadd.f32 0.0, %v1060
        %v1062 = vpop.f32.mrf.mxu0
        %v1063 = vpop.f32.mrf.mxu0
        %v1064 = vpop.f32.mrf.mxu0
        %1065 = vdwg.mxu0
        %1067 = vrot.lane.b32.xlu0 %v1061, 8
        %v1068 = vpop.permute.xlu0 %1067
        %vm1070 = vcmask 130112
        %1071 = vst.msk [vmem:[#allocation2] sm:$0xff] %vm1070, %v1068
        %1072 = vrot.lane.b32.xlu0 %v841, 112
        %v1073 = vpop.permute.xlu0 %1072
        %1074 = vrot.lane.b32.xlu0 %v842, 112
        %v1075 = vpop.permute.xlu0 %1074
        %v1077 = vsel %vm845, %v1073, 0
        %v1080 = vsel %vm845, %v1075, 0
        %1082 = vmatprep.subr.bf16.mxu0 0
        %1083 = vmatpush1.bf16.xpose.msra.mxu0 0
        %1084 = vmatprep.subr.bf16.mxu0 0
        %1085 = vmatpush1.bf16.xpose.msra.mxu0 0
        %1086 = vmatprep.subr.bf16.mxu0 0
        %1087 = vmatpush1.bf16.xpose.msra.mxu0 0
        %1088 = vmatprep.subr.bf16.mxu0 0
        %1089 = vmatpush1.bf16.xpose.msra.mxu0 0
        %1090 = vmatprep.subr.bf16.mxu0 0
        %1091 = vmatpush1.bf16.xpose.msra.mxu0 0
        %1092 = vmatprep.subr.bf16.mxu0 0
        %1093 = vmatpush1.bf16.xpose.msra.mxu0 0
        %1094 = vmatprep.subr.bf16.mxu0 0
        %1095 = vmatpush1.bf16.xpose.msra.mxu0 0
        %1096 = vmatprep.subr.bf16.mxu0 0
        %1097 = vmatpush1.bf16.xpose.msra.mxu0 %v1080
        %1098 = vmatprep.subr.bf16.mxu0 0
        %1099 = vmatpush2.bf16.xpose.msra.mxu0 0
        %1100 = vmatprep.subr.bf16.mxu0 0
        %1101 = vmatpush2.bf16.xpose.msra.mxu0 0
        %1102 = vmatprep.subr.bf16.mxu0 0
        %1103 = vmatpush2.bf16.xpose.msra.mxu0 0
        %1104 = vmatprep.subr.bf16.mxu0 0
        %1105 = vmatpush2.bf16.xpose.msra.mxu0 0
        %1106 = vmatprep.subr.bf16.mxu0 0
        %1107 = vmatpush2.bf16.xpose.msra.mxu0 0
        %1108 = vmatprep.subr.bf16.mxu0 0
        %1109 = vmatpush2.bf16.xpose.msra.mxu0 0
        %1110 = vmatprep.subr.bf16.mxu0 0
        %1111 = vmatpush2.bf16.xpose.msra.mxu0 0
        %1112 = vmatprep.subr.bf16.mxu0 0
        %1113 = vmatpush2.bf16.xpose.msra.mxu0 0
        %1114 = vmatprep.mubr.bf16.mxu0 0
        %1115 = vmatmul.mubr.bf16.gmra.mxu0 %v1077
        %v1116 = vpop.f32.mrf.mxu0
        %v1117 = vadd.f32 %v844, %v1116
        %v1118 = vpop.f32.mrf.mxu0
        %v1119 = vpop.f32.mrf.mxu0
        %v1120 = vpop.f32.mrf.mxu0
        %1121 = vdwg.mxu0
        %v1122 = vsel %vm845, %v1117, -inf
        %1123 = vmax.xlane.f32.xlu0 %v1122
        %v1124 = vpop.xlane.xlu0 %1123
        %v1125 = vsub.f32 %v1117, %v1124
        %v1126 = vmul.f32 %v1125, 1.442695
        %v1127 = vpow.pop %v1126
        %v1128 = vsel %vm845, %v1127, 0.0
        %1129 = vadd.xlane.f32.xlu0 %v1128
        %v1130 = vpop.xlane.xlu0 %1129
        %v1131 = vrcp.pop %v1130
        %v1132 = vmul.f32 %v1127, %v1131
        %v1133 = vpack.c.bf16 %v1132, %v1132
        %1134 = vrot.lane.b32.xlu0 %v842, 80
        %v1135 = vpop.permute.xlu0 %1134
        %v1137 = vsel %vm845, %v1133, 0
        %v1140 = vsel %vm910, %v1135, 0
        %1142 = vmatprep.subr.bf16.mxu0 0
        %1143 = vmatpush1.bf16.msra.mxu0 0
        %1144 = vmatprep.subr.bf16.mxu0 0
        %1145 = vmatpush1.bf16.msra.mxu0 0
        %1146 = vmatprep.subr.bf16.mxu0 0
        %1147 = vmatpush1.bf16.msra.mxu0 0
        %1148 = vmatprep.subr.bf16.mxu0 0
        %1149 = vmatpush1.bf16.msra.mxu0 0
        %1150 = vmatprep.subr.bf16.mxu0 0
        %1151 = vmatpush1.bf16.msra.mxu0 0
        %1152 = vmatprep.subr.bf16.mxu0 0
        %1153 = vmatpush1.bf16.msra.mxu0 0
        %1154 = vmatprep.subr.bf16.mxu0 0
        %1155 = vmatpush1.bf16.msra.mxu0 0
        %1156 = vmatprep.subr.bf16.mxu0 0
        %1157 = vmatpush1.bf16.msra.mxu0 %v1140
        %1158 = vmatprep.subr.bf16.mxu0 0
        %1159 = vmatpush2.bf16.msra.mxu0 0
        %1160 = vmatprep.subr.bf16.mxu0 0
        %1161 = vmatpush2.bf16.msra.mxu0 0
        %1162 = vmatprep.subr.bf16.mxu0 0
        %1163 = vmatpush2.bf16.msra.mxu0 0
        %1164 = vmatprep.subr.bf16.mxu0 0
        %1165 = vmatpush2.bf16.msra.mxu0 0
        %1166 = vmatprep.subr.bf16.mxu0 0
        %1167 = vmatpush2.bf16.msra.mxu0 0
        %1168 = vmatprep.subr.bf16.mxu0 0
        %1169 = vmatpush2.bf16.msra.mxu0 0
        %1170 = vmatprep.subr.bf16.mxu0 0
        %1171 = vmatpush2.bf16.msra.mxu0 0
        %1172 = vmatprep.subr.bf16.mxu0 0
        %1173 = vmatpush2.bf16.msra.mxu0 0
        %1174 = vmatprep.mubr.bf16.mxu0 0
        %1175 = vmatmul.mubr.bf16.gmra.mxu0 %v1137
        %v1176 = vpop.f32.mrf.mxu0
        %v1177 = vadd.f32 0.0, %v1176
        %v1178 = vpop.f32.mrf.mxu0
        %v1179 = vpop.f32.mrf.mxu0
        %v1180 = vpop.f32.mrf.mxu0
        %1181 = vdwg.mxu0
        %1183 = vrot.lane.b32.xlu0 %v1177, 16
        %v1184 = vpop.permute.xlu0 %1183
        %vm1186 = vcmask 195712
        %1187 = vst.msk [vmem:[#allocation2] sm:$0xff] %vm1186, %v1184
        %1188 = vrot.lane.b32.xlu0 %v841, 104
        %v1189 = vpop.permute.xlu0 %1188
        %1190 = vrot.lane.b32.xlu0 %v842, 104
        %v1191 = vpop.permute.xlu0 %1190
        %v1193 = vsel %vm845, %v1189, 0
        %v1196 = vsel %vm845, %v1191, 0
        %1198 = vmatprep.subr.bf16.mxu0 0
        %1199 = vmatpush1.bf16.xpose.msra.mxu0 0
        %1200 = vmatprep.subr.bf16.mxu0 0
        %1201 = vmatpush1.bf16.xpose.msra.mxu0 0
        %1202 = vmatprep.subr.bf16.mxu0 0
        %1203 = vmatpush1.bf16.xpose.msra.mxu0 0
        %1204 = vmatprep.subr.bf16.mxu0 0
        %1205 = vmatpush1.bf16.xpose.msra.mxu0 0
        %1206 = vmatprep.subr.bf16.mxu0 0
        %1207 = vmatpush1.bf16.xpose.msra.mxu0 0
        %1208 = vmatprep.subr.bf16.mxu0 0
        %1209 = vmatpush1.bf16.xpose.msra.mxu0 0
        %1210 = vmatprep.subr.bf16.mxu0 0
        %1211 = vmatpush1.bf16.xpose.msra.mxu0 0
        %1212 = vmatprep.subr.bf16.mxu0 0
        %1213 = vmatpush1.bf16.xpose.msra.mxu0 %v1196
        %1214 = vmatprep.subr.bf16.mxu0 0
        %1215 = vmatpush2.bf16.xpose.msra.mxu0 0
        %1216 = vmatprep.subr.bf16.mxu0 0
        %1217 = vmatpush2.bf16.xpose.msra.mxu0 0
        %1218 = vmatprep.subr.bf16.mxu0 0
        %1219 = vmatpush2.bf16.xpose.msra.mxu0 0
        %1220 = vmatprep.subr.bf16.mxu0 0
        %1221 = vmatpush2.bf16.xpose.msra.mxu0 0
        %1222 = vmatprep.subr.bf16.mxu0 0
        %1223 = vmatpush2.bf16.xpose.msra.mxu0 0
        %1224 = vmatprep.subr.bf16.mxu0 0
        %1225 = vmatpush2.bf16.xpose.msra.mxu0 0
        %1226 = vmatprep.subr.bf16.mxu0 0
        %1227 = vmatpush2.bf16.xpose.msra.mxu0 0
        %1228 = vmatprep.subr.bf16.mxu0 0
        %1229 = vmatpush2.bf16.xpose.msra.mxu0 0
        %1230 = vmatprep.mubr.bf16.mxu0 0
        %1231 = vmatmul.mubr.bf16.gmra.mxu0 %v1193
        %v1232 = vpop.f32.mrf.mxu0
        %v1233 = vadd.f32 %v844, %v1232
        %v1234 = vpop.f32.mrf.mxu0
        %v1235 = vpop.f32.mrf.mxu0
        %v1236 = vpop.f32.mrf.mxu0
        %1237 = vdwg.mxu0
        %v1238 = vsel %vm845, %v1233, -inf
        %1239 = vmax.xlane.f32.xlu0 %v1238
        %v1240 = vpop.xlane.xlu0 %1239
        %v1241 = vsub.f32 %v1233, %v1240
        %v1242 = vmul.f32 %v1241, 1.442695
        %v1243 = vpow.pop %v1242
        %v1244 = vsel %vm845, %v1243, 0.0
        %1245 = vadd.xlane.f32.xlu0 %v1244
        %v1246 = vpop.xlane.xlu0 %1245
        %v1247 = vrcp.pop %v1246
        %v1248 = vmul.f32 %v1243, %v1247
        %v1249 = vpack.c.bf16 %v1248, %v1248
        %1250 = vrot.lane.b32.xlu0 %v842, 72
        %v1251 = vpop.permute.xlu0 %1250
        %v1253 = vsel %vm845, %v1249, 0
        %v1256 = vsel %vm910, %v1251, 0
        %1258 = vmatprep.subr.bf16.mxu0 0
        %1259 = vmatpush1.bf16.msra.mxu0 0
        %1260 = vmatprep.subr.bf16.mxu0 0
        %1261 = vmatpush1.bf16.msra.mxu0 0
        %1262 = vmatprep.subr.bf16.mxu0 0
        %1263 = vmatpush1.bf16.msra.mxu0 0
        %1264 = vmatprep.subr.bf16.mxu0 0
        %1265 = vmatpush1.bf16.msra.mxu0 0
        %1266 = vmatprep.subr.bf16.mxu0 0
        %1267 = vmatpush1.bf16.msra.mxu0 0
        %1268 = vmatprep.subr.bf16.mxu0 0
        %1269 = vmatpush1.bf16.msra.mxu0 0
        %1270 = vmatprep.subr.bf16.mxu0 0
        %1271 = vmatpush1.bf16.msra.mxu0 0
        %1272 = vmatprep.subr.bf16.mxu0 0
        %1273 = vmatpush1.bf16.msra.mxu0 %v1256
        %1274 = vmatprep.subr.bf16.mxu0 0
        %1275 = vmatpush2.bf16.msra.mxu0 0
        %1276 = vmatprep.subr.bf16.mxu0 0
        %1277 = vmatpush2.bf16.msra.mxu0 0
        %1278 = vmatprep.subr.bf16.mxu0 0
        %1279 = vmatpush2.bf16.msra.mxu0 0
        %1280 = vmatprep.subr.bf16.mxu0 0
        %1281 = vmatpush2.bf16.msra.mxu0 0
        %1282 = vmatprep.subr.bf16.mxu0 0
        %1283 = vmatpush2.bf16.msra.mxu0 0
        %1284 = vmatprep.subr.bf16.mxu0 0
        %1285 = vmatpush2.bf16.msra.mxu0 0
        %1286 = vmatprep.subr.bf16.mxu0 0
        %1287 = vmatpush2.bf16.msra.mxu0 0
        %1288 = vmatprep.subr.bf16.mxu0 0
        %1289 = vmatpush2.bf16.msra.mxu0 0
        %1290 = vmatprep.mubr.bf16.mxu0 0
        %1291 = vmatmul.mubr.bf16.gmra.mxu0 %v1253
        %v1292 = vpop.f32.mrf.mxu0
        %v1293 = vadd.f32 0.0, %v1292
        %v1294 = vpop.f32.mrf.mxu0
        %v1295 = vpop.f32.mrf.mxu0
        %v1296 = vpop.f32.mrf.mxu0
        %1297 = vdwg.mxu0
        %1299 = vrot.lane.b32.xlu0 %v1293, 24
        %v1300 = vpop.permute.xlu0 %1299
        %vm1302 = vcmask 261312
        %1303 = vst.msk [vmem:[#allocation2] sm:$0xff] %vm1302, %v1300
        %v1304 = vld [vmem:[#allocation2] sm:$0xff]
        %v1305 = vpack.c.bf16 %v1304, %v1304
        %v1306 = vld [vmem:[%s9] sm:$0xf]
        %v1307 = vld [vmem:[%s9 + $0x4] sm:$0xf]
        %v1308 = vld [vmem:[%s9 + $0x8] sm:$0xf]
        %v1309 = vld [vmem:[%s9 + $0xc] sm:$0xf]
        %v1310 = vld [vmem:[%s10] sm:$0x1]
        %v1312 = vlaneseq
        %v1313 = vshrl.u32 %v1312, 7
        %v1314 = vsub.s32 0, %v1313
        %v1315 = vrot.slane %v1310, %v1314
        %v1321 = vunpack.c.l.b16 %v1306
        %v1322 = vunpack.c.l.b16 %v1307
        %v1323 = vunpack.c.l.b16 %v1308
        %v1324 = vunpack.c.l.b16 %v1309
        %v1325 = vpack.c.b16 %v1322, %v1321
        %v1326 = vpack.c.b16 %v1324, %v1323
        %v1330 = vsel %vm662, %v1305, 0
        %1332 = vmatprep.subr.bf16.mxu0 0
        %1333 = vmatpush1.bf16.msra.mxu0 0
        %1334 = vmatprep.subr.bf16.mxu0 0
        %1335 = vmatpush1.bf16.msra.mxu0 0
        %1336 = vmatprep.subr.bf16.mxu0 0
        %1337 = vmatpush1.bf16.msra.mxu0 0
        %1338 = vmatprep.subr.bf16.mxu0 0
        %1339 = vmatpush1.bf16.msra.mxu0 0
        %1340 = vmatprep.subr.bf16.mxu0 0
        %1341 = vmatpush1.bf16.msra.mxu0 0
        %1342 = vmatprep.subr.bf16.mxu0 0
        %1343 = vmatpush1.bf16.msra.mxu0 0
        %1344 = vmatprep.subr.bf16.mxu0 0
        %1345 = vmatpush1.bf16.msra.mxu0 %v1326
        %1346 = vmatprep.subr.bf16.mxu0 0
        %1347 = vmatpush1.bf16.msra.mxu0 %v1325
        %1348 = vmatprep.subr.bf16.mxu0 0
        %1349 = vmatpush2.bf16.msra.mxu0 0
        %1350 = vmatprep.subr.bf16.mxu0 0
        %1351 = vmatpush2.bf16.msra.mxu0 0
        %1352 = vmatprep.subr.bf16.mxu0 0
        %1353 = vmatpush2.bf16.msra.mxu0 0
        %1354 = vmatprep.subr.bf16.mxu0 0
        %1355 = vmatpush2.bf16.msra.mxu0 0
        %1356 = vmatprep.subr.bf16.mxu0 0
        %1357 = vmatpush2.bf16.msra.mxu0 0
        %1358 = vmatprep.subr.bf16.mxu0 0
        %1359 = vmatpush2.bf16.msra.mxu0 0
        %1360 = vmatprep.subr.bf16.mxu0 0
        %1361 = vmatpush2.bf16.msra.mxu0 0
        %1362 = vmatprep.subr.bf16.mxu0 0
        %1363 = vmatpush2.bf16.msra.mxu0 0
        %1364 = vmatprep.mubr.bf16.mxu0 0
        %1365 = vmatmul.mubr.bf16.gmra.mxu0 %v1330
        %v1366 = vpop.f32.mrf.mxu0
        %v1367 = vadd.f32 %v1315, %v1366
        %v1368 = vpop.f32.mrf.mxu0
        %v1369 = vpop.f32.mrf.mxu0
        %v1370 = vpop.f32.mrf.mxu0
        %1371 = vdwg.mxu0
        %v1372 = vadd.f32 %v657, %v1367
        %v1373 = vld [vmem:[%s11] sm:$0x1]
        %v1374 = vld [vmem:[%s12] sm:$0x1]
        %v1375 = vsel %vm662, %v1372, 0.0
        %1376 = vadd.xlane.f32.xlu0 %v1375
        %v1377 = vpop.xlane.xlu0 %1376
        %v1378 = vmul.f32 %v1377, %v666
        %v1379 = vsub.f32 %v1372, %v1378
        %v1380 = vmul.f32 %v1379, %v1379
        %v1381 = vsel %vm662, %v1380, 0.0
        %1382 = vadd.xlane.f32.xlu0 %v1381
        %v1383 = vpop.xlane.xlu0 %1382
        %v1384 = vmul.f32 %v1383, %v666
        %v1385 = vadd.f32 %v1384, 1e-05
        %v1386 = vrsqrt.pop %v1385
        %v1387 = vmul.f32 %v1379, %v1386
        %v1389 = vlaneseq
        %v1390 = vshrl.u32 %v1389, 7
        %v1391 = vsub.s32 0, %v1390
        %v1392 = vrot.slane %v1373, %v1391
        %v1394 = vmul.f32 %v1387, %v1392
        %v1396 = vlaneseq
        %v1397 = vshrl.u32 %v1396, 7
        %v1398 = vsub.s32 0, %v1397
        %v1399 = vrot.slane %v1374, %v1398
        %v1401 = vadd.f32 %v1394, %v1399
        %v1402 = vpack.c.bf16 %v1401, %v1401
        %v1403 = vld [vmem:[%s13] sm:$0xf]
        %v1404 = vld [vmem:[%s13 + $0x4] sm:$0xf]
        %v1405 = vld [vmem:[%s13 + $0x8] sm:$0xf]
        %v1406 = vld [vmem:[%s13 + $0xc] sm:$0xf]
        %v1407 = vld [vmem:[%s14] sm:$0x1]
        %v1409 = vlaneseq
        %v1410 = vshrl.u32 %v1409, 7
        %v1411 = vsub.s32 0, %v1410
        %v1412 = vrot.slane %v1407, %v1411
        %v1418 = vunpack.c.l.b16 %v1403
        %v1419 = vunpack.c.l.b16 %v1404
        %v1420 = vunpack.c.l.b16 %v1405
        %v1421 = vunpack.c.l.b16 %v1406
        %v1422 = vpack.c.b16 %v1419, %v1418
        %v1423 = vpack.c.b16 %v1421, %v1420
        %v1427 = vsel %vm662, %v1402, 0
        %1429 = vmatprep.subr.bf16.mxu0 0
        %1430 = vmatpush1.bf16.msra.mxu0 0
        %1431 = vmatprep.subr.bf16.mxu0 0
        %1432 = vmatpush1.bf16.msra.mxu0 0
        %1433 = vmatprep.subr.bf16.mxu0 0
        %1434 = vmatpush1.bf16.msra.mxu0 0
        %1435 = vmatprep.subr.bf16.mxu0 0
        %1436 = vmatpush1.bf16.msra.mxu0 0
        %1437 = vmatprep.subr.bf16.mxu0 0
        %1438 = vmatpush1.bf16.msra.mxu0 0
        %1439 = vmatprep.subr.bf16.mxu0 0
        %1440 = vmatpush1.bf16.msra.mxu0 0
        %1441 = vmatprep.subr.bf16.mxu0 0
        %1442 = vmatpush1.bf16.msra.mxu0 %v1423
        %1443 = vmatprep.subr.bf16.mxu0 0
        %1444 = vmatpush1.bf16.msra.mxu0 %v1422
        %1445 = vmatprep.subr.bf16.mxu0 0
        %1446 = vmatpush2.bf16.msra.mxu0 0
        %1447 = vmatprep.subr.bf16.mxu0 0
        %1448 = vmatpush2.bf16.msra.mxu0 0
        %1449 = vmatprep.subr.bf16.mxu0 0
        %1450 = vmatpush2.bf16.msra.mxu0 0
        %1451 = vmatprep.subr.bf16.mxu0 0
        %1452 = vmatpush2.bf16.msra.mxu0 0
        %1453 = vmatprep.subr.bf16.mxu0 0
        %1454 = vmatpush2.bf16.msra.mxu0 0
        %1455 = vmatprep.subr.bf16.mxu0 0
        %1456 = vmatpush2.bf16.msra.mxu0 0
        %1457 = vmatprep.subr.bf16.mxu0 0
        %1458 = vmatpush2.bf16.msra.mxu0 0
        %1459 = vmatprep.subr.bf16.mxu0 0
        %1460 = vmatpush2.bf16.msra.mxu0 0
        %1461 = vmatprep.mubr.bf16.mxu0 0
        %1462 = vmatmul.mubr.bf16.gmra.mxu0 %v1427
        %v1463 = vpop.f32.mrf.mxu0
        %v1464 = vadd.f32 %v1412, %v1463
        %v1465 = vpop.f32.mrf.mxu0
        %v1466 = vpop.f32.mrf.mxu0
        %v1467 = vpop.f32.mrf.mxu0
        %1468 = vdwg.mxu0
        %v1469 = vmul.f32 %v1464, 0.5
        %v1470 = vmul.f32 %v1464, 0.70710677
        %v1471 = verf.f32.pop %v1470
        %v1472 = vadd.f32 %v1471, 1.0
        %v1473 = vmul.f32 %v1469, %v1472
        %v1474 = vpack.c.bf16 %v1473, %v1473
        %v1475 = vld [vmem:[%s15] sm:$0xf]
        %v1476 = vld [vmem:[%s15 + $0x4] sm:$0xf]
        %v1477 = vld [vmem:[%s15 + $0x8] sm:$0xf]
        %v1478 = vld [vmem:[%s15 + $0xc] sm:$0xf]
        %v1479 = vld [vmem:[%s15 + $0x10] sm:$0xf]
        %v1480 = vld [vmem:[%s15 + $0x14] sm:$0xf]
        %v1481 = vld [vmem:[%s15 + $0x18] sm:$0xf]
        %v1482 = vld [vmem:[%s15 + $0x1c] sm:$0xf]
        %v1483 = vld [vmem:[%s15 + $0x20] sm:$0xf]
        %v1484 = vld [vmem:[%s15 + $0x24] sm:$0xf]
        %v1485 = vld [vmem:[%s15 + $0x28] sm:$0xf]
        %v1486 = vld [vmem:[%s15 + $0x2c] sm:$0xf]
        %v1487 = vld [vmem:[%s15 + $0x30] sm:$0xf]
        %v1488 = vld [vmem:[%s15 + $0x34] sm:$0xf]
        %v1489 = vld [vmem:[%s15 + $0x38] sm:$0xf]
        %v1490 = vld [vmem:[%s15 + $0x3c] sm:$0xf]
        %v1491 = vld [vmem:[%s16] sm:$0x1]
        %v1493 = vlaneseq
        %v1494 = vshrl.u32 %v1493, 7
        %v1495 = vsub.s32 0, %v1494
        %v1496 = vrot.slane %v1491, %v1495
        %v1514 = vunpack.c.l.b16 %v1475
        %v1515 = vunpack.c.l.b16 %v1476
        %v1516 = vunpack.c.l.b16 %v1477
        %v1517 = vunpack.c.l.b16 %v1478
        %v1518 = vunpack.c.l.b16 %v1479
        %v1519 = vunpack.c.l.b16 %v1480
        %v1520 = vunpack.c.l.b16 %v1481
        %v1521 = vunpack.c.l.b16 %v1482
        %v1522 = vunpack.c.l.b16 %v1483
        %v1523 = vunpack.c.l.b16 %v1484
        %v1524 = vunpack.c.l.b16 %v1485
        %v1525 = vunpack.c.l.b16 %v1486
        %v1526 = vunpack.c.l.b16 %v1487
        %v1527 = vunpack.c.l.b16 %v1488
        %v1528 = vunpack.c.l.b16 %v1489
        %v1529 = vunpack.c.l.b16 %v1490
        %v1530 = vpack.c.b16 %v1515, %v1514
        %v1531 = vpack.c.b16 %v1517, %v1516
        %v1532 = vpack.c.b16 %v1519, %v1518
        %v1533 = vpack.c.b16 %v1521, %v1520
        %v1534 = vpack.c.b16 %v1523, %v1522
        %v1535 = vpack.c.b16 %v1525, %v1524
        %v1536 = vpack.c.b16 %v1527, %v1526
        %v1537 = vpack.c.b16 %v1529, %v1528
        %1546 = vmatprep.subr.bf16.mxu0 0
        %1547 = vmatpush1.bf16.msra.mxu0 %v1537
        %1548 = vmatprep.subr.bf16.mxu0 0
        %1549 = vmatpush1.bf16.msra.mxu0 %v1536
        %1550 = vmatprep.subr.bf16.mxu0 0
        %1551 = vmatpush1.bf16.msra.mxu0 %v1535
        %1552 = vmatprep.subr.bf16.mxu0 0
        %1553 = vmatpush1.bf16.msra.mxu0 %v1534
        %1554 = vmatprep.subr.bf16.mxu0 0
        %1555 = vmatpush1.bf16.msra.mxu0 %v1533
        %1556 = vmatprep.subr.bf16.mxu0 0
        %1557 = vmatpush1.bf16.msra.mxu0 %v1532
        %1558 = vmatprep.subr.bf16.mxu0 0
        %1559 = vmatpush1.bf16.msra.mxu0 %v1531
        %1560 = vmatprep.subr.bf16.mxu0 0
        %1561 = vmatpush1.bf16.msra.mxu0 %v1530
        %1562 = vmatprep.subr.bf16.mxu0 0
        %1563 = vmatpush2.bf16.msra.mxu0 0
        %1564 = vmatprep.subr.bf16.mxu0 0
        %1565 = vmatpush2.bf16.msra.mxu0 0
        %1566 = vmatprep.subr.bf16.mxu0 0
        %1567 = vmatpush2.bf16.msra.mxu0 0
        %1568 = vmatprep.subr.bf16.mxu0 0
        %1569 = vmatpush2.bf16.msra.mxu0 0
        %1570 = vmatprep.subr.bf16.mxu0 0
        %1571 = vmatpush2.bf16.msra.mxu0 0
        %1572 = vmatprep.subr.bf16.mxu0 0
        %1573 = vmatpush2.bf16.msra.mxu0 0
        %1574 = vmatprep.subr.bf16.mxu0 0
        %1575 = vmatpush2.bf16.msra.mxu0 0
        %1576 = vmatprep.subr.bf16.mxu0 0
        %1577 = vmatpush2.bf16.msra.mxu0 0
        %1578 = vmatprep.mubr.bf16.mxu0 0
        %1579 = vmatmul.mubr.bf16.gmra.mxu0 %v1474
        %v1580 = vpop.f32.mrf.mxu0
        %v1581 = vadd.f32 %v1496, %v1580
        %v1582 = vpop.f32.mrf.mxu0
        %v1583 = vpop.f32.mrf.mxu0
        %v1584 = vpop.f32.mrf.mxu0
        %1585 = vdwg.mxu0
        %v1586 = vadd.f32 %v1372, %v1581
        %1587 = vst.msk [vmem:[%s644] sm:$0xff] %vm662, %v1586
        %s1588 = sand.u32 %s430, 1
        %s1589 = scalar_lea.sflag [#allocation5], %s1588
        %s1590 = sand.u32 %s430, 1
        %s1591 = smul.addr %s1590, 8
        %s1592 = scalar_lea.vmem [#allocation12], %s1591
        // Predicated region
        $region109: #{tpu_custom_call.1} parent=87 // pred_check
          %p1593 = pneg %p440
        $region110: #{tpu_custom_call.1} parent=87 // pred_check_branch
          %1595 = sbr.rel (%p1593) target = $region112
        $region111: #{tpu_custom_call.1} parent=87 // pred_region
          %s1597 = ssub.s32 128, 128
          %1598 = vsyncadd %s1589, %s1597
          %s1599 = sadd.s32 %s39, %s38
          %s1600 = smul.addr %s1599, 128
          %s1601 = scalar_lea.hbm %s17, %s1600
          %s1603 = sshll.u32 %s1592, 4
          %s1604 = int_to_ptr.vmem [resolvable:$true] %s1603
          %1606 = dma.vmem_to_hbm [thread:$0]  %s1604, 128, %s1601, %s1589
        $region112: #{tpu_custom_call.1} parent=87 // pred_fallthru
          _
      $region88: #{tpu_custom_call.1} parent=5 // pred_fallthru
        _
      %p1607 = scmp.le.s32.totalorder 2, %s29
      // Predicated region
      $region113: #{tpu_custom_call.1} parent=5 // pred_check
        %p1608 = pneg %p1607
      $region114: #{tpu_custom_call.1} parent=5 // pred_check_branch
        %1610 = sbr.rel (%p1608) target = $region116
      $region115: #{tpu_custom_call.1} parent=5 // pred_region
        %s1611 = ssub.s32 %s29, 2
        // Predicated region
        $region117: #{tpu_custom_call.1} parent=115 // pred_check
          %p1612 = pneg %p446
        $region118: #{tpu_custom_call.1} parent=115 // pred_check_branch
          %1614 = sbr.rel (%p1612) target = $region120
        $region119: #{tpu_custom_call.1} parent=115 // pred_region
          %s1615 = sand.u32 %s431, 1
          %s1616 = scalar_lea.sflag [#allocation5], %s1615
          %s1617 = sand.u32 %s431, 1
          %s1618 = smul.addr %s1617, 8
          %s1619 = scalar_lea.vmem [#allocation12], %s1618
          %1620 = dma.done %s1616, 128
        $region120: #{tpu_custom_call.1} parent=115 // pred_fallthru
          _
      $region116: #{tpu_custom_call.1} parent=5 // pred_fallthru
        _
    $region6: #{tpu_custom_call.1} parent=1 // loop_footer
      %s33 = sadd.s32 1, %s29
    $region7: #{tpu_custom_call.1} parent=1 // loop_footer_branch
      %28 = sbr.rel target = $region3
    $region8: #{tpu_custom_call.1} parent=1 // loop_exit
      _
    %1621 = vsyncpa [#allocation4], 1
    %s1622 = scalar_lea.sflag [#allocation4], 1
    %1623 = vsyncpa %s1622, 1
    %1624 = vsyncpa [#allocation7], 1
    %1625 = vsyncpa [#allocation10], 1
    %1626 = vsyncpa [#allocation5], 1
    %s1627 = scalar_lea.sflag [#allocation5], 1
    %1628 = vsyncpa %s1627, 1

</llo_original>
